<compile_context>
chip_gen: v7x
topology: tpu7x:2x2x1
jax: 0.10.0
libtpu: 0.0.40
codegen_flags: <defaults>
</compile_context>

<pallas_src>
import functools
import math

import jax
import jax.numpy as jnp
from jax.experimental import pallas as pl
from jax.experimental.pallas import tpu as pltpu


# ----------------------------- small helpers ---------------------------------

def _vmem_spec():
    # Whole array resident in VMEM (grid-invariant operand, no per-step re-blocking).
    return pl.BlockSpec(memory_space=pltpu.MemorySpace.VMEM)


def _vmem_limit(est_bytes):
    # Explicit scoped-VMEM budget (defaults are only 16/32 MiB); clamp to stay v7x-safe.
    return int(min(64 * 1024 * 1024, max(32 * 1024 * 1024, int(1.25 * est_bytes))))


def _default_row_tile():
    # 512-row tiles reach ~85% of HBM roofline on v5e/v6e; v7x has half the VMEM -> 256.
    try:
        info = pltpu.get_tpu_info()
        if getattr(info, "vmem_capacity_bytes", 128 << 20) <= (64 << 20):
            return 256
    except Exception:
        pass
    return 512


def _erf_poly(z):
    # Abramowitz & Stegun 7.1.26 polynomial erf, |abs err| < 1.5e-7 (f32-exact for GELU).
    # TODO(synk): replace with lax.erf once its Mosaic lowering is verified.
    p = 0.3275911
    a1, a2, a3, a4, a5 = 0.254829592, -0.284496736, 1.421413741, -1.453152027, 1.061405429
    s = jnp.where(z >= 0.0, 1.0, -1.0)
    za = jnp.abs(z)
    t = 1.0 / (1.0 + p * za)
    poly = ((((a5 * t + a4) * t + a3) * t + a2) * t + a1) * t
    return s * (1.0 - poly * jnp.exp(-za * za))


def _gelu_exact(x):
    # 0.5 * x * (1 + erf(x / sqrt(2)))  — matches torch.nn.GELU() (exact form).
    return 0.5 * x * (1.0 + _erf_poly(x * 0.7071067811865476))


def _layernorm(x, g, b, eps):
    mu = jnp.mean(x, axis=-1, keepdims=True)
    xc = x - mu
    var = jnp.mean(xc * xc, axis=-1, keepdims=True)
    return xc * jax.lax.rsqrt(var + eps) * g + b


# ----------------------------- Pallas kernels --------------------------------

def _linear_kernel(x_ref, w_ref, b_ref, o_ref):
    # o = x @ w + b   (bf16 operands, f32 accumulation)
    x = x_ref[...].astype(jnp.bfloat16)
    o_ref[...] = (jnp.dot(x, w_ref[...], preferred_element_type=jnp.float32)
                  + b_ref[...]).astype(o_ref.dtype)


def linear(x, w, b, row_tile=512):
    """Row-tiled linear: [M, K] @ [K, N] + [N] (patch embedding)."""
    M, K = x.shape
    N = w.shape[1]
    tm = min(row_tile, M)
    vmem = _vmem_limit(w.nbytes + 2 * (tm * K * 4 + tm * N * 4) + tm * N * 4)
    return pl.pallas_call(
        _linear_kernel,
        grid=(pl.cdiv(M, tm),),
        in_specs=[pl.BlockSpec((tm, K), lambda i: (i, 0)), _vmem_spec(), _vmem_spec()],
        out_specs=pl.BlockSpec((tm, N), lambda i: (i, 0)),
        out_shape=jax.ShapeDtypeStruct((M, N), jnp.float32),
        compiler_params=pltpu.CompilerParams(dimension_semantics=("parallel",),
                                             vmem_limit_bytes=vmem),
    )(x, w, b.reshape(1, N))


def _ln_matmul_kernel(x_ref, g_ref, b_ref, w_ref, bias_ref, o_ref, *, eps):
    # Fused: LayerNorm -> matmul (+bias).  bf16 matmul operands, f32 accumulation.
    x = x_ref[...].astype(jnp.float32)
    x_ln = _layernorm(x, g_ref[...], b_ref[...], eps).astype(jnp.bfloat16)
    o_ref[...] = (jnp.dot(x_ln, w_ref[...], preferred_element_type=jnp.float32)
                  + bias_ref[...]).astype(o_ref.dtype)


def ln_matmul(x, g, b, w, bias, eps, row_tile):
    """LN1 + fused QKV projection, row-tiled over B*S rows; bf16 output."""
    M, D = x.shape
    N = w.shape[1]
    tm = min(row_tile, M)
    vmem = _vmem_limit(w.nbytes + 2 * (tm * D * 4 + tm * N * 2) + 2 * tm * N * 4)
    return pl.pallas_call(
        functools.partial(_ln_matmul_kernel, eps=eps),
        grid=(pl.cdiv(M, tm),),
        in_specs=[pl.BlockSpec((tm, D), lambda i: (i, 0)),
                  _vmem_spec(), _vmem_spec(), _vmem_spec(), _vmem_spec()],
        out_specs=pl.BlockSpec((tm, N), lambda i: (i, 0)),
        out_shape=jax.ShapeDtypeStruct((M, N), jnp.bfloat16),
        compiler_params=pltpu.CompilerParams(dimension_semantics=("parallel",),
                                             vmem_limit_bytes=vmem),
    )(x, g.reshape(1, D), b.reshape(1, D), w, bias.reshape(1, N))


def _attn_head_kernel(qkv_ref, o_ref, *, head_dim, valid_len):
    # One (batch, head) slab: softmax(q k^T) v.  Only this head's [S,S] is ever live.
    qkv = qkv_ref[...]                                        # [S, 3*Dh] bf16
    S = qkv.shape[0]
    q = qkv[:, 0 * head_dim:1 * head_dim]                     # 1/sqrt(Dh) folded into W_q
    k = qkv[:, 1 * head_dim:2 * head_dim]
    v = qkv[:, 2 * head_dim:3 * head_dim]
    s = jax.lax.dot_general(q, k, (((1,), (1,)), ((), ())),
                            preferred_element_type=jnp.float32)   # [S, S] f32
    if valid_len < S:                                         # mask zero-padded key rows
        col = jax.lax.broadcasted_iota(jnp.int32, s.shape, 1)
        s = jnp.where(col < valid_len, s, -1e30)
    s = s - jnp.max(s, axis=-1, keepdims=True)
    p = jnp.exp(s)
    p = p * (1.0 / jnp.sum(p, axis=-1, keepdims=True))        # exact normalization
    o_ref[...] = jnp.dot(p.astype(jnp.bfloat16), v,
                         preferred_element_type=jnp.float32).astype(o_ref.dtype)


def attention_heads(qkv, head_dim, valid_len):
    """qkv: [B, H, S, 3*Dh] bf16 (per-head q|k|v) -> ctx [B, H, S, Dh] bf16."""
    B, H, S, T3 = qkv.shape
    vmem = _vmem_limit(2 * (S * T3 * 2 + S * head_dim * 2) + 3 * S * S * 4)
    # TODO(synk): for extremely long sequences switch to a KV-tiled online softmax.
    return pl.pallas_call(
        functools.partial(_attn_head_kernel, head_dim=head_dim, valid_len=valid_len),
        grid=(B, H),
        in_specs=[pl.BlockSpec((None, None, S, T3), lambda bb, hh: (bb, hh, 0, 0))],
        out_specs=pl.BlockSpec((None, None, S, head_dim), lambda bb, hh: (bb, hh, 0, 0)),
        out_shape=jax.ShapeDtypeStruct((B, H, S, head_dim), jnp.bfloat16),
        compiler_params=pltpu.CompilerParams(dimension_semantics=("parallel", "parallel"),
                                             vmem_limit_bytes=vmem),
    )(qkv)


def _wo_mlp_kernel(ctx_ref, h_ref, wo_ref, bo_ref, g_ref, b_ref,
                   w1_ref, b1_ref, w2_ref, b2_ref, o_ref, *, eps):
    # Fused: ctx @ Wo + bo + residual -> LN2 -> fc1 -> exact GELU -> fc2 -> + residual.
    h = h_ref[...].astype(jnp.float32)
    attn = jnp.dot(ctx_ref[...], wo_ref[...],
                   preferred_element_type=jnp.float32) + bo_ref[...]   # single K=D proj
    h_mid = h + attn
    x_ln = _layernorm(h_mid, g_ref[...], b_ref[...], eps).astype(jnp.bfloat16)
    h1 = jnp.dot(x_ln, w1_ref[...], preferred_element_type=jnp.float32) + b1_ref[...]
    h1 = _gelu_exact(h1).astype(jnp.bfloat16)
    out = jnp.dot(h1, w2_ref[...], preferred_element_type=jnp.float32) + b2_ref[...]
    o_ref[...] = (h_mid + out).astype(o_ref.dtype)


def wo_mlp_block(ctx, h, lyr, eps, row_tile):
    """ctx, h: [M, D] -> h + Wo(ctx) + MLP(LN2(...)).  Row-tiled, weights VMEM-resident."""
    M, D = h.shape
    I = lyr["fc1_w"].shape[1]
    tm = min(row_tile, M)
    wbytes = lyr["o_w"].nbytes + lyr["fc1_w"].nbytes + lyr["fc2_w"].nbytes
    vmem = _vmem_limit(wbytes + 2 * (tm * D * 2 + 2 * tm * D * 4) + 2 * tm * I * 4)
    return pl.pallas_call(
        functools.partial(_wo_mlp_kernel, eps=eps),
        grid=(pl.cdiv(M, tm),),
        in_specs=[pl.BlockSpec((tm, D), lambda i: (i, 0)),
                  pl.BlockSpec((tm, D), lambda i: (i, 0)),
                  _vmem_spec(), _vmem_spec(), _vmem_spec(), _vmem_spec(),
                  _vmem_spec(), _vmem_spec(), _vmem_spec(), _vmem_spec()],
        out_specs=pl.BlockSpec((tm, D), lambda i: (i, 0)),
        out_shape=jax.ShapeDtypeStruct((M, D), jnp.float32),
        compiler_params=pltpu.CompilerParams(dimension_semantics=("parallel",),
                                             vmem_limit_bytes=vmem),
    )(ctx, h,
      lyr["o_w"], lyr["o_b"].reshape(1, D),
      lyr["ln2_g"].reshape(1, D), lyr["ln2_b"].reshape(1, D),
      lyr["fc1_w"], lyr["fc1_b"].reshape(1, I),
      lyr["fc2_w"], lyr["fc2_b"].reshape(1, D))


def _head_kernel(x_ref, g_ref, b_ref, w_ref, bias_ref, o_ref, *, eps):
    # Final LayerNorm on CLS/DIST rows fused with the eval-mode classifier:
    # (cls_head(x_cls) + dist_head(x_dist)) / 2 == [x_cls | x_dist] @ [[Wc];[Wd]]/2 + ...
    x = x_ref[...].astype(jnp.float32)                        # [B, 2, D]
    x_ln = _layernorm(x, g_ref[...], b_ref[...], eps)
    xcat = jnp.concatenate([x_ln[:, 0, :], x_ln[:, 1, :]], axis=-1).astype(jnp.bfloat16)
    o_ref[...] = (jnp.dot(xcat, w_ref[...], preferred_element_type=jnp.float32)
                  + bias_ref[...]).astype(o_ref.dtype)


def classifier_head(h2, params, eps):
    """h2: [B, 2, D] (CLS, DIST rows) -> logits [B, C].  Lane-padded 128-wide output."""
    B, _, D = h2.shape
    C = params["cls_w"].shape[1]
    Cp = max(128, ((C + 127) // 128) * 128)
    pad = Cp - C
    wcat = jnp.pad(jnp.concatenate([params["cls_w"], params["dist_w"]], axis=0) * 0.5,
                   ((0, 0), (0, pad)))                         # [2D, Cp] bf16
    bcat = jnp.pad(0.5 * (params["cls_b"] + params["dist_b"]), (0, pad)).reshape(1, Cp)
    out = pl.pallas_call(
        functools.partial(_head_kernel, eps=eps),
        out_shape=jax.ShapeDtypeStruct((B, Cp), jnp.float32),
    )(h2, params["ln_f_g"].reshape(1, D), params["ln_f_b"].reshape(1, D), wcat, bcat)
    return out[:, :C]


# ------------------------------ model glue ------------------------------------

def init_params(key, cfg):
    D = cfg["hidden"]
    I = cfg["intermediate"]
    C = cfg["n_classes"]
    P = cfg["num_patches"]
    ph = cfg["patch_size"]
    H = cfg["heads"]
    Dh = D // H

    keys = iter(jax.random.split(key, 256))

    def lin(in_dim, out_dim, dtype=jnp.bfloat16):
        # nn.Linear weight [out,in] transposed to [in,out]; matmul weights stored bf16.
        w = jax.random.normal(next(keys), (in_dim, out_dim), jnp.float32) * 0.02
        b = jnp.zeros((out_dim,), jnp.float32)
        return w.astype(dtype), b

    params = {}
    # patch projection Conv2d(1, D, (ph, ph), stride) as a [ph*ph, D] matmul weight
    params["patch_w"], params["patch_b"] = lin(ph * ph, D)
    params["cls_token"] = jax.random.normal(next(keys), (1, 1, D), jnp.float32) * 0.02
    params["dist_token"] = jax.random.normal(next(keys), (1, 1, D), jnp.float32) * 0.02
    params["pos_emb"] = jax.random.normal(next(keys), (1, P + 2, D), jnp.float32) * 0.02

    layers = []
    for _ in range(cfg["num_layers"]):
        lyr = {}
        lyr["ln1_g"] = jnp.ones((D,), jnp.float32)
        lyr["ln1_b"] = jnp.zeros((D,), jnp.float32)
        # Fused QKV projection.  Columns are head-major ((q|k|v) per head) so the kernel
        # output views as [B,S,H,3Dh] without data movement; 1/sqrt(Dh) folded into Q.
        qw, qb = lin(D, D, jnp.float32)
        kw, kb = lin(D, D, jnp.float32)
        vw, vb = lin(D, D, jnp.float32)
        scale = 1.0 / math.sqrt(Dh)
        qw, qb = qw * scale, qb * scale
        wqkv = jnp.stack([qw.reshape(D, H, Dh), kw.reshape(D, H, Dh),
                          vw.reshape(D, H, Dh)], axis=2).reshape(D, 3 * D)
        bqkv = jnp.stack([qb.reshape(H, Dh), kb.reshape(H, Dh),
                          vb.reshape(H, Dh)], axis=1).reshape(3 * D)
        lyr["qkv_w"] = wqkv.astype(jnp.bfloat16)
        lyr["qkv_b"] = bqkv
        lyr["o_w"], lyr["o_b"] = lin(D, D)
        lyr["ln2_g"] = jnp.ones((D,), jnp.float32)
        lyr["ln2_b"] = jnp.zeros((D,), jnp.float32)
        lyr["fc1_w"], lyr["fc1_b"] = lin(D, I)
        lyr["fc2_w"], lyr["fc2_b"] = lin(I, D)
        layers.append(lyr)
    params["layers"] = layers

    params["ln_f_g"] = jnp.ones((D,), jnp.float32)
    params["ln_f_b"] = jnp.zeros((D,), jnp.float32)
    params["cls_w"], params["cls_b"] = lin(D, C)
    params["dist_w"], params["dist_b"] = lin(D, C)
    return params


def student_ast_forward(params, x, cfg):
    """x: [B, max_length(time), num_mel_bins(freq)] -> logits [B, n_classes]."""
    B, T, Fm = x.shape
    D = cfg["hidden"]
    H = cfg["heads"]
    Dh = D // H
    ph = pw = cfg["patch_size"]
    sf, st = cfg["frequency_stride"], cfg["time_stride"]
    eps = cfg["eps"]
    row_tile = _default_row_tile()

    # --- ASTPatchEmbeddings: unsqueeze(1).transpose(2,3) then Conv2d ---
    x_img = jnp.transpose(x, (0, 2, 1))                      # [B, freq, time]
    F_out = (Fm - ph) // sf + 1
    T_out = (T - pw) // st + 1
    P = F_out * T_out
    if sf == ph and st == pw and Fm == F_out * ph and T == T_out * pw:
        # non-overlapping patches: pure reshape/transpose (no gather HLO)
        patches = x_img.reshape(B, F_out, ph, T_out, pw).transpose(0, 1, 3, 2, 4)
    else:
        rows = (jnp.arange(F_out) * sf)[:, None, None, None] + jnp.arange(ph)[None, None, :, None]
        cols = (jnp.arange(T_out) * st)[None, :, None, None] + jnp.arange(pw)[None, None, None, :]
        patches = x_img[:, rows, cols]                       # [B, F_out, T_out, ph, pw]
    patches = patches.reshape(B * P, ph * pw)
    emb = linear(patches, params["patch_w"], params["patch_b"], row_tile).reshape(B, P, D)

    # --- ASTEmbeddings: [CLS], [DIST], +pos (dropout p=0.0, eval) ---
    cls = jnp.broadcast_to(params["cls_token"], (B, 1, D))
    dist = jnp.broadcast_to(params["dist_token"], (B, 1, D))
    h = jnp.concatenate([cls, dist, emb], axis=1) + params["pos_emb"]

    # pad the token axis to a multiple of 16 (dense bf16 sublanes); pad keys are masked.
    S_real = P + 2
    S = ((S_real + 15) // 16) * 16
    if S != S_real:
        h = jnp.pad(h, ((0, 0), (0, S - S_real), (0, 0)))

    # --- ASTEncoder (pre-LN ViT layers) ---
    for lyr in params["layers"]:
        hf = h.reshape(B * S, D)
        # (1) LN1 + fused QKV (bf16, head-major columns, q pre-scaled)
        qkv = ln_matmul(hf, lyr["ln1_g"], lyr["ln1_b"], lyr["qkv_w"], lyr["qkv_b"],
                        eps, row_tile)
        # TODO(synk): fold this transpose into the producer's out_spec (in-kernel relayout
        # or strided DMA) to save one qkv HBM round-trip per layer.
        qkv = qkv.reshape(B, S, H, 3 * Dh).transpose(0, 2, 1, 3)   # [B, H, S, 3Dh]
        # (2) per-(batch, head) softmax attention, both grid axes parallel
        ctx = attention_heads(qkv, Dh, S_real)                     # [B, H, S, Dh]
        ctx = ctx.transpose(0, 2, 1, 3).reshape(B * S, D)          # head-major concat == D
        # (3) single K=D output projection + residual + LN2 + MLP + residual
        h = wo_mlp_block(ctx, hf, lyr, eps, row_tile).reshape(B, S, D)

    # --- final LayerNorm on CLS/DIST rows + eval-mode StudentClassificationHead ---
    return classifier_head(h[:, 0:2, :], params, eps)


# --------------------------------- main ---------------------------------------

if __name__ == "__main__":
    # Small, module-consistent config (defaults scaled down: hidden 384->32, heads 6->2,
    # intermediate 4*hidden, square patch conv with freq/time strides).
    cfg = dict(
        hidden=32,
        heads=2,
        intermediate=128,
        num_layers=2,
        patch_size=4,
        frequency_stride=4,
        time_stride=4,
        max_length=16,     # time frames
        num_mel_bins=8,    # input_dim
        n_classes=5,
        eps=1e-12,
    )
    F_out = (cfg["num_mel_bins"] - cfg["patch_size"]) // cfg["frequency_stride"] + 1
    T_out = (cfg["max_length"] - cfg["patch_size"]) // cfg["time_stride"] + 1
    cfg["num_patches"] = F_out * T_out

    key = jax.random.PRNGKey(0)
    pkey, xkey = jax.random.split(key)
    params = init_params(pkey, cfg)
    x = jax.random.normal(
        xkey, (2, cfg["max_length"], cfg["num_mel_bins"]), dtype=jnp.float32
    )

    fwd = jax.jit(functools.partial(student_ast_forward, cfg=cfg))
    logits = fwd(params, x)
    jax.block_until_ready(logits)

    assert logits.shape == (2, cfg["n_classes"])
    assert logits.dtype == jnp.float32
    print("KERNEL_OK")
</pallas_src>

<mosaic_0001>
module attributes {stable_mosaic.version = 11 : i64} {
  func.func @_linear_kernel(%arg0: i32, %arg1: memref<16x16xf32, #tpu.memory_space<vmem>>, %arg2: memref<16x32xbf16, #tpu.memory_space<vmem>>, %arg3: memref<1x32xf32, #tpu.memory_space<vmem>>, %arg4: memref<16x32xf32, #tpu.memory_space<vmem>>) attributes {dimension_semantics = [#tpu.dimension_semantics<parallel>], iteration_bounds = array<i64: 1>, scalar_prefetch = 0 : i64, scratch_operands = 0 : i64, tpu.core_type = #tpu.core_type<tc>, window_params = [{transform_indices = @transform_0, window_bounds = array<i64: 16, 16>}, {pipeline_mode = #tpu.pipeline_mode<synchronous>, transform_indices = @transform_1, window_bounds = array<i64: 16, 32>}, {pipeline_mode = #tpu.pipeline_mode<synchronous>, transform_indices = @transform_2, window_bounds = array<i64: 1, 32>}, {transform_indices = @transform_3, window_bounds = array<i64: 16, 32>}]} {
    %c0 = arith.constant 0 : index
    %c0_0 = arith.constant 0 : index
    %0 = vector.load %arg1[%c0, %c0_0] : memref<16x16xf32, #tpu.memory_space<vmem>>, vector<16x16xf32>
    %1 = arith.truncf %0 : vector<16x16xf32> to vector<16x16xbf16>
    %c0_1 = arith.constant 0 : index
    %c0_2 = arith.constant 0 : index
    %2 = vector.load %arg2[%c0_1, %c0_2] : memref<16x32xbf16, #tpu.memory_space<vmem>>, vector<16x32xbf16>
    %cst = arith.constant dense<0.000000e+00> : vector<16x32xf32>
    %3 = tpu.matmul %1, %2, %cst {dimension_numbers = #tpu.dot_dimension_numbers<[1], [0], [0], [1], [0, 0, 1, 1], [], []>} : vector<16x16xbf16>, vector<16x32xbf16>, vector<16x32xf32> -> vector<16x32xf32>
    %c0_3 = arith.constant 0 : index
    %c0_4 = arith.constant 0 : index
    %4 = vector.load %arg3[%c0_3, %c0_4] : memref<1x32xf32, #tpu.memory_space<vmem>>, vector<1x32xf32>
    %5 = vector.broadcast %4 : vector<1x32xf32> to vector<16x32xf32>
    %6 = arith.addf %3, %5 : vector<16x32xf32>
    %c0_5 = arith.constant 0 : index
    %c0_6 = arith.constant 0 : index
    %7 = vector.load %arg4[%c0_5, %c0_6] : memref<16x32xf32, #tpu.memory_space<vmem>>, vector<16x32xf32>
    tpu.vector_store %arg4[%c0_5, %c0_6], %6 {strides = array<i32>} : memref<16x32xf32, #tpu.memory_space<vmem>>, vector<16x32xf32>,
    return
  }
  func.func @transform_0(%arg0: i32) -> (i32, i32) {
    %c0_i32 = arith.constant 0 : i32
    %c0_i32_0 = arith.constant 0 : i32
    return %arg0, %c0_i32 : i32, i32
  }
  func.func @transform_1(%arg0: i32) -> (i32, i32) {
    %c0_i32 = arith.constant 0 : i32
    %c0_i32_0 = arith.constant 0 : i32
    %c0_i32_1 = arith.constant 0 : i32
    return %c0_i32, %c0_i32_0 : i32, i32
  }
  func.func @transform_2(%arg0: i32) -> (i32, i32) {
    %c0_i32 = arith.constant 0 : i32
    %c0_i32_0 = arith.constant 0 : i32
    %c0_i32_1 = arith.constant 0 : i32
    return %c0_i32, %c0_i32_0 : i32, i32
  }
  func.func @transform_3(%arg0: i32) -> (i32, i32) {
    %c0_i32 = arith.constant 0 : i32
    %c0_i32_0 = arith.constant 0 : i32
    return %arg0, %c0_i32 : i32, i32
  }
}

module attributes {stable_mosaic.version = 11 : i64} {
  func.func @_ln_matmul_kernel(%arg0: i32, %arg1: memref<32x32xf32, #tpu.memory_space<vmem>>, %arg2: memref<1x32xf32, #tpu.memory_space<vmem>>, %arg3: memref<1x32xf32, #tpu.memory_space<vmem>>, %arg4: memref<32x96xbf16, #tpu.memory_space<vmem>>, %arg5: memref<1x96xf32, #tpu.memory_space<vmem>>, %arg6: memref<32x96xbf16, #tpu.memory_space<vmem>>) attributes {dimension_semantics = [#tpu.dimension_semantics<parallel>], iteration_bounds = array<i64: 1>, scalar_prefetch = 0 : i64, scratch_operands = 0 : i64, tpu.core_type = #tpu.core_type<tc>, window_params = [{transform_indices = @transform_0, window_bounds = array<i64: 32, 32>}, {pipeline_mode = #tpu.pipeline_mode<synchronous>, transform_indices = @transform_1, window_bounds = array<i64: 1, 32>}, {pipeline_mode = #tpu.pipeline_mode<synchronous>, transform_indices = @transform_2, window_bounds = array<i64: 1, 32>}, {pipeline_mode = #tpu.pipeline_mode<synchronous>, transform_indices = @transform_3, window_bounds = array<i64: 32, 96>}, {pipeline_mode = #tpu.pipeline_mode<synchronous>, transform_indices = @transform_4, window_bounds = array<i64: 1, 96>}, {transform_indices = @transform_5, window_bounds = array<i64: 32, 96>}]} {
    %c0 = arith.constant 0 : index
    %c0_0 = arith.constant 0 : index
    %0 = vector.load %arg1[%c0, %c0_0] : memref<32x32xf32, #tpu.memory_space<vmem>>, vector<32x32xf32>
    %c0_1 = arith.constant 0 : index
    %c0_2 = arith.constant 0 : index
    %1 = vector.load %arg2[%c0_1, %c0_2] : memref<1x32xf32, #tpu.memory_space<vmem>>, vector<1x32xf32>
    %c0_3 = arith.constant 0 : index
    %c0_4 = arith.constant 0 : index
    %2 = vector.load %arg3[%c0_3, %c0_4] : memref<1x32xf32, #tpu.memory_space<vmem>>, vector<1x32xf32>
    %cst = arith.constant dense<0.000000e+00> : vector<32xf32>
    %3 = vector.multi_reduction <add>, %0, %cst [1] : vector<32x32xf32> to vector<32xf32>
    %4 = vector.shape_cast %3 : vector<32xf32> to vector<32x1xf32>
    %cst_5 = arith.constant 3.200000e+01 : f32
    %5 = vector.broadcast %cst_5 : f32 to vector<32x1xf32>
    %6 = arith.divf %4, %5 : vector<32x1xf32>
    %7 = vector.broadcast %6 : vector<32x1xf32> to vector<32x32xf32>
    %8 = arith.subf %0, %7 : vector<32x32xf32>
    %9 = arith.mulf %8, %8 : vector<32x32xf32>
    %cst_6 = arith.constant dense<0.000000e+00> : vector<32xf32>
    %10 = vector.multi_reduction <add>, %9, %cst_6 [1] : vector<32x32xf32> to vector<32xf32>
    %11 = vector.shape_cast %10 : vector<32xf32> to vector<32x1xf32>
    %cst_7 = arith.constant 3.200000e+01 : f32
    %12 = vector.broadcast %cst_7 : f32 to vector<32x1xf32>
    %13 = arith.divf %11, %12 : vector<32x1xf32>
    %cst_8 = arith.constant 9.99999996E-13 : f32
    %14 = vector.broadcast %cst_8 : f32 to vector<32x1xf32>
    %15 = arith.addf %13, %14 : vector<32x1xf32>
    %16 = math.rsqrt %15 : vector<32x1xf32>
    %17 = vector.broadcast %16 : vector<32x1xf32> to vector<32x32xf32>
    %18 = arith.mulf %8, %17 : vector<32x32xf32>
    %19 = vector.broadcast %1 : vector<1x32xf32> to vector<32x32xf32>
    %20 = arith.mulf %18, %19 : vector<32x32xf32>
    %21 = vector.broadcast %2 : vector<1x32xf32> to vector<32x32xf32>
    %22 = arith.addf %20, %21 : vector<32x32xf32>
    %23 = arith.truncf %22 : vector<32x32xf32> to vector<32x32xbf16>
    %c0_9 = arith.constant 0 : index
    %c0_10 = arith.constant 0 : index
    %24 = vector.load %arg4[%c0_9, %c0_10] : memref<32x96xbf16, #tpu.memory_space<vmem>>, vector<32x96xbf16>
    %cst_11 = arith.constant dense<0.000000e+00> : vector<32x96xf32>
    %25 = tpu.matmul %23, %24, %cst_11 {dimension_numbers = #tpu.dot_dimension_numbers<[1], [0], [0], [1], [0, 0, 1, 1], [], []>} : vector<32x32xbf16>, vector<32x96xbf16>, vector<32x96xf32> -> vector<32x96xf32>
    %c0_12 = arith.constant 0 : index
    %c0_13 = arith.constant 0 : index
    %26 = vector.load %arg5[%c0_12, %c0_13] : memref<1x96xf32, #tpu.memory_space<vmem>>, vector<1x96xf32>
    %27 = vector.broadcast %26 : vector<1x96xf32> to vector<32x96xf32>
    %28 = arith.addf %25, %27 : vector<32x96xf32>
    %29 = arith.truncf %28 : vector<32x96xf32> to vector<32x96xbf16>
    %c0_14 = arith.constant 0 : index
    %c0_15 = arith.constant 0 : index
    %30 = vector.load %arg6[%c0_14, %c0_15] : memref<32x96xbf16, #tpu.memory_space<vmem>>, vector<32x96xbf16>
    tpu.vector_store %arg6[%c0_14, %c0_15], %29 {strides = array<i32>} : memref<32x96xbf16, #tpu.memory_space<vmem>>, vector<32x96xbf16>,
    return
  }
  func.func @transform_0(%arg0: i32) -> (i32, i32) {
    %c0_i32 = arith.constant 0 : i32
    %c0_i32_0 = arith.constant 0 : i32
    return %arg0, %c0_i32 : i32, i32
  }
  func.func @transform_1(%arg0: i32) -> (i32, i32) {
    %c0_i32 = arith.constant 0 : i32
    %c0_i32_0 = arith.constant 0 : i32
    %c0_i32_1 = arith.constant 0 : i32
    return %c0_i32, %c0_i32_0 : i32, i32
  }
  func.func @transform_2(%arg0: i32) -> (i32, i32) {
    %c0_i32 = arith.constant 0 : i32
    %c0_i32_0 = arith.constant 0 : i32
    %c0_i32_1 = arith.constant 0 : i32
    return %c0_i32, %c0_i32_0 : i32, i32
  }
  func.func @transform_3(%arg0: i32) -> (i32, i32) {
    %c0_i32 = arith.constant 0 : i32
    %c0_i32_0 = arith.constant 0 : i32
    %c0_i32_1 = arith.constant 0 : i32
    return %c0_i32, %c0_i32_0 : i32, i32
  }
  func.func @transform_4(%arg0: i32) -> (i32, i32) {
    %c0_i32 = arith.constant 0 : i32
    %c0_i32_0 = arith.constant 0 : i32
    %c0_i32_1 = arith.constant 0 : i32
    return %c0_i32, %c0_i32_0 : i32, i32
  }
  func.func @transform_5(%arg0: i32) -> (i32, i32) {
    %c0_i32 = arith.constant 0 : i32
    %c0_i32_0 = arith.constant 0 : i32
    return %arg0, %c0_i32 : i32, i32
  }
}

module attributes {stable_mosaic.version = 11 : i64} {
  func.func @_attn_head_kernel(%arg0: i32, %arg1: i32, %arg2: memref<1x1x16x48xbf16, #tpu.memory_space<vmem>>, %arg3: memref<1x1x16x16xbf16, #tpu.memory_space<vmem>>) attributes {dimension_semantics = [#tpu.dimension_semantics<parallel>, #tpu.dimension_semantics<parallel>], iteration_bounds = array<i64: 2, 2>, scalar_prefetch = 0 : i64, scratch_operands = 0 : i64, tpu.core_type = #tpu.core_type<tc>, window_params = [{transform_indices = @transform_0, window_bounds = array<i64: 1, 1, 16, 48>}, {transform_indices = @transform_1, window_bounds = array<i64: 1, 1, 16, 16>}]} {
    %c0 = arith.constant 0 : index
    %c0_0 = arith.constant 0 : index
    %c0_1 = arith.constant 0 : index
    %c0_2 = arith.constant 0 : index
    %0 = vector.load %arg2[%c0, %c0_0, %c0_1, %c0_2] : memref<1x1x16x48xbf16, #tpu.memory_space<vmem>>, vector<1x1x16x48xbf16>
    %1 = vector.shape_cast %0 : vector<1x1x16x48xbf16> to vector<16x48xbf16>
    %2 = vector.extract_strided_slice %1 {offsets = [0, 0], sizes = [16, 16], strides = [1, 1]} : vector<16x48xbf16> to vector<16x16xbf16>
    %3 = vector.extract_strided_slice %1 {offsets = [0, 16], sizes = [16, 16], strides = [1, 1]} : vector<16x48xbf16> to vector<16x16xbf16>
    %4 = vector.extract_strided_slice %1 {offsets = [0, 32], sizes = [16, 16], strides = [1, 1]} : vector<16x48xbf16> to vector<16x16xbf16>
    %cst = arith.constant dense<0.000000e+00> : vector<16x16xf32>
    %5 = tpu.matmul %2, %3, %cst {dimension_numbers = #tpu.dot_dimension_numbers<[1], [1], [0], [0], [0, 0, 1, 0], [], []>} : vector<16x16xbf16>, vector<16x16xbf16>, vector<16x16xf32> -> vector<16x16xf32>
    %6 = tpu.iota {dimensions = array<i32: 1>} : vector<16x16xi32>
    %c10_i32 = arith.constant 10 : i32
    %7 = vector.broadcast %c10_i32 : i32 to vector<16x16xi32>
    %8 = arith.cmpi slt, %6, %7 : vector<16x16xi32>
    %cst_3 = arith.constant -1.000000e+30 : f32
    %9 = vector.broadcast %cst_3 : f32 to vector<16x16xf32>
    %10 = arith.select %8, %5, %9 : vector<16x16xi1>, vector<16x16xf32>
    %cst_4 = arith.constant dense<0xFF800000> : vector<16xf32>
    %11 = vector.multi_reduction <maximumf>, %10, %cst_4 [1] : vector<16x16xf32> to vector<16xf32>
    %12 = vector.shape_cast %11 : vector<16xf32> to vector<16x1xf32>
    %13 = vector.broadcast %12 : vector<16x1xf32> to vector<16x16xf32>
    %14 = arith.subf %10, %13 : vector<16x16xf32>
    %15 = math.exp %14 : vector<16x16xf32>
    %cst_5 = arith.constant dense<0.000000e+00> : vector<16xf32>
    %16 = vector.multi_reduction <add>, %15, %cst_5 [1] : vector<16x16xf32> to vector<16xf32>
    %17 = vector.shape_cast %16 : vector<16xf32> to vector<16x1xf32>
    %cst_6 = arith.constant 1.000000e+00 : f32
    %18 = vector.broadcast %cst_6 : f32 to vector<16x1xf32>
    %19 = arith.divf %18, %17 : vector<16x1xf32>
    %20 = vector.broadcast %19 : vector<16x1xf32> to vector<16x16xf32>
    %21 = arith.mulf %15, %20 : vector<16x16xf32>
    %22 = arith.truncf %21 : vector<16x16xf32> to vector<16x16xbf16>
    %cst_7 = arith.constant dense<0.000000e+00> : vector<16x16xf32>
    %23 = tpu.matmul %22, %4, %cst_7 {dimension_numbers = #tpu.dot_dimension_numbers<[1], [0], [0], [1], [0, 0, 1, 1], [], []>} : vector<16x16xbf16>, vector<16x16xbf16>, vector<16x16xf32> -> vector<16x16xf32>
    %24 = arith.truncf %23 : vector<16x16xf32> to vector<16x16xbf16>
    %c0_8 = arith.constant 0 : index
    %c0_9 = arith.constant 0 : index
    %c0_10 = arith.constant 0 : index
    %c0_11 = arith.constant 0 : index
    %25 = vector.load %arg3[%c0_8, %c0_9, %c0_10, %c0_11] : memref<1x1x16x16xbf16, #tpu.memory_space<vmem>>, vector<1x1x16x16xbf16>
    %26 = vector.shape_cast %25 : vector<1x1x16x16xbf16> to vector<16x16xbf16>
    %27 = vector.shape_cast %24 : vector<16x16xbf16> to vector<1x1x16x16xbf16>
    tpu.vector_store %arg3[%c0_8, %c0_9, %c0_10, %c0_11], %27 {strides = array<i32>} : memref<1x1x16x16xbf16, #tpu.memory_space<vmem>>, vector<1x1x16x16xbf16>,
    return
  }
  func.func @transform_0(%arg0: i32, %arg1: i32) -> (i32, i32, i32, i32) {
    %c0_i32 = arith.constant 0 : i32
    %c0_i32_0 = arith.constant 0 : i32
    %c0_i32_1 = arith.constant 0 : i32
    return %arg0, %arg1, %c0_i32, %c0_i32_0 : i32, i32, i32, i32
  }
  func.func @transform_1(%arg0: i32, %arg1: i32) -> (i32, i32, i32, i32) {
    %c0_i32 = arith.constant 0 : i32
    %c0_i32_0 = arith.constant 0 : i32
    %c0_i32_1 = arith.constant 0 : i32
    return %arg0, %arg1, %c0_i32, %c0_i32_0 : i32, i32, i32, i32
  }
}

module attributes {stable_mosaic.version = 11 : i64} {
  func.func @_wo_mlp_kernel(%arg0: i32, %arg1: memref<32x32xbf16, #tpu.memory_space<vmem>>, %arg2: memref<32x32xf32, #tpu.memory_space<vmem>>, %arg3: memref<32x32xbf16, #tpu.memory_space<vmem>>, %arg4: memref<1x32xf32, #tpu.memory_space<vmem>>, %arg5: memref<1x32xf32, #tpu.memory_space<vmem>>, %arg6: memref<1x32xf32, #tpu.memory_space<vmem>>, %arg7: memref<32x128xbf16, #tpu.memory_space<vmem>>, %arg8: memref<1x128xf32, #tpu.memory_space<vmem>>, %arg9: memref<128x32xbf16, #tpu.memory_space<vmem>>, %arg10: memref<1x32xf32, #tpu.memory_space<vmem>>, %arg11: memref<32x32xf32, #tpu.memory_space<vmem>>) attributes {dimension_semantics = [#tpu.dimension_semantics<parallel>], iteration_bounds = array<i64: 1>, scalar_prefetch = 0 : i64, scratch_operands = 0 : i64, tpu.core_type = #tpu.core_type<tc>, window_params = [{transform_indices = @transform_0, window_bounds = array<i64: 32, 32>}, {transform_indices = @transform_1, window_bounds = array<i64: 32, 32>}, {pipeline_mode = #tpu.pipeline_mode<synchronous>, transform_indices = @transform_2, window_bounds = array<i64: 32, 32>}, {pipeline_mode = #tpu.pipeline_mode<synchronous>, transform_indices = @transform_3, window_bounds = array<i64: 1, 32>}, {pipeline_mode = #tpu.pipeline_mode<synchronous>, transform_indices = @transform_4, window_bounds = array<i64: 1, 32>}, {pipeline_mode = #tpu.pipeline_mode<synchronous>, transform_indices = @transform_5, window_bounds = array<i64: 1, 32>}, {pipeline_mode = #tpu.pipeline_mode<synchronous>, transform_indices = @transform_6, window_bounds = array<i64: 32, 128>}, {pipeline_mode = #tpu.pipeline_mode<synchronous>, transform_indices = @transform_7, window_bounds = array<i64: 1, 128>}, {pipeline_mode = #tpu.pipeline_mode<synchronous>, transform_indices = @transform_8, window_bounds = array<i64: 128, 32>}, {pipeline_mode = #tpu.pipeline_mode<synchronous>, transform_indices = @transform_9, window_bounds = array<i64: 1, 32>}, {transform_indices = @transform_10, window_bounds = array<i64: 32, 32>}]} {
    %c0 = arith.constant 0 : index
    %c0_0 = arith.constant 0 : index
    %0 = vector.load %arg2[%c0, %c0_0] : memref<32x32xf32, #tpu.memory_space<vmem>>, vector<32x32xf32>
    %c0_1 = arith.constant 0 : index
    %c0_2 = arith.constant 0 : index
    %1 = vector.load %arg1[%c0_1, %c0_2] : memref<32x32xbf16, #tpu.memory_space<vmem>>, vector<32x32xbf16>
    %c0_3 = arith.constant 0 : index
    %c0_4 = arith.constant 0 : index
    %2 = vector.load %arg3[%c0_3, %c0_4] : memref<32x32xbf16, #tpu.memory_space<vmem>>, vector<32x32xbf16>
    %cst = arith.constant dense<0.000000e+00> : vector<32x32xf32>
    %3 = tpu.matmul %1, %2, %cst {dimension_numbers = #tpu.dot_dimension_numbers<[1], [0], [0], [1], [0, 0, 1, 1], [], []>} : vector<32x32xbf16>, vector<32x32xbf16>, vector<32x32xf32> -> vector<32x32xf32>
    %c0_5 = arith.constant 0 : index
    %c0_6 = arith.constant 0 : index
    %4 = vector.load %arg4[%c0_5, %c0_6] : memref<1x32xf32, #tpu.memory_space<vmem>>, vector<1x32xf32>
    %5 = vector.broadcast %4 : vector<1x32xf32> to vector<32x32xf32>
    %6 = arith.addf %3, %5 : vector<32x32xf32>
    %7 = arith.addf %0, %6 : vector<32x32xf32>
    %c0_7 = arith.constant 0 : index
    %c0_8 = arith.constant 0 : index
    %8 = vector.load %arg5[%c0_7, %c0_8] : memref<1x32xf32, #tpu.memory_space<vmem>>, vector<1x32xf32>
    %c0_9 = arith.constant 0 : index
    %c0_10 = arith.constant 0 : index
    %9 = vector.load %arg6[%c0_9, %c0_10] : memref<1x32xf32, #tpu.memory_space<vmem>>, vector<1x32xf32>
    %cst_11 = arith.constant dense<0.000000e+00> : vector<32xf32>
    %10 = vector.multi_reduction <add>, %7, %cst_11 [1] : vector<32x32xf32> to vector<32xf32>
    %11 = vector.shape_cast %10 : vector<32xf32> to vector<32x1xf32>
    %cst_12 = arith.constant 3.200000e+01 : f32
    %12 = vector.broadcast %cst_12 : f32 to vector<32x1xf32>
    %13 = arith.divf %11, %12 : vector<32x1xf32>
    %14 = vector.broadcast %13 : vector<32x1xf32> to vector<32x32xf32>
    %15 = arith.subf %7, %14 : vector<32x32xf32>
    %16 = arith.mulf %15, %15 : vector<32x32xf32>
    %cst_13 = arith.constant dense<0.000000e+00> : vector<32xf32>
    %17 = vector.multi_reduction <add>, %16, %cst_13 [1] : vector<32x32xf32> to vector<32xf32>
    %18 = vector.shape_cast %17 : vector<32xf32> to vector<32x1xf32>
    %cst_14 = arith.constant 3.200000e+01 : f32
    %19 = vector.broadcast %cst_14 : f32 to vector<32x1xf32>
    %20 = arith.divf %18, %19 : vector<32x1xf32>
    %cst_15 = arith.constant 9.99999996E-13 : f32
    %21 = vector.broadcast %cst_15 : f32 to vector<32x1xf32>
    %22 = arith.addf %20, %21 : vector<32x1xf32>
    %23 = math.rsqrt %22 : vector<32x1xf32>
    %24 = vector.broadcast %23 : vector<32x1xf32> to vector<32x32xf32>
    %25 = arith.mulf %15, %24 : vector<32x32xf32>
    %26 = vector.broadcast %8 : vector<1x32xf32> to vector<32x32xf32>
    %27 = arith.mulf %25, %26 : vector<32x32xf32>
    %28 = vector.broadcast %9 : vector<1x32xf32> to vector<32x32xf32>
    %29 = arith.addf %27, %28 : vector<32x32xf32>
    %30 = arith.truncf %29 : vector<32x32xf32> to vector<32x32xbf16>
    %c0_16 = arith.constant 0 : index
    %c0_17 = arith.constant 0 : index
    %31 = vector.load %arg7[%c0_16, %c0_17] : memref<32x128xbf16, #tpu.memory_space<vmem>>, vector<32x128xbf16>
    %cst_18 = arith.constant dense<0.000000e+00> : vector<32x128xf32>
    %32 = tpu.matmul %30, %31, %cst_18 {dimension_numbers = #tpu.dot_dimension_numbers<[1], [0], [0], [1], [0, 0, 1, 1], [], []>} : vector<32x32xbf16>, vector<32x128xbf16>, vector<32x128xf32> -> vector<32x128xf32>
    %c0_19 = arith.constant 0 : index
    %c0_20 = arith.constant 0 : index
    %33 = vector.load %arg8[%c0_19, %c0_20] : memref<1x128xf32, #tpu.memory_space<vmem>>, vector<1x128xf32>
    %34 = vector.broadcast %33 : vector<1x128xf32> to vector<32x128xf32>
    %35 = arith.addf %32, %34 : vector<32x128xf32>
    %cst_21 = arith.constant 5.000000e-01 : f32
    %36 = vector.broadcast %cst_21 : f32 to vector<32x128xf32>
    %37 = arith.mulf %36, %35 : vector<32x128xf32>
    %cst_22 = arith.constant 0.707106769 : f32
    %38 = vector.broadcast %cst_22 : f32 to vector<32x128xf32>
    %39 = arith.mulf %35, %38 : vector<32x128xf32>
    %cst_23 = arith.constant 0.000000e+00 : f32
    %40 = vector.broadcast %cst_23 : f32 to vector<32x128xf32>
    %41 = arith.cmpf oge, %39, %40 : vector<32x128xf32>
    %cst_24 = arith.constant 1.000000e+00 : f32
    %cst_25 = arith.constant -1.000000e+00 : f32
    %42 = vector.broadcast %cst_24 : f32 to vector<32x128xf32>
    %43 = vector.broadcast %cst_25 : f32 to vector<32x128xf32>
    %44 = arith.select %41, %42, %43 : vector<32x128xi1>, vector<32x128xf32>
    %45 = math.absf %39 : vector<32x128xf32>
    %cst_26 = arith.constant 0.327591091 : f32
    %46 = vector.broadcast %cst_26 : f32 to vector<32x128xf32>
    %47 = arith.mulf %46, %45 : vector<32x128xf32>
    %cst_27 = arith.constant 1.000000e+00 : f32
    %48 = vector.broadcast %cst_27 : f32 to vector<32x128xf32>
    %49 = arith.addf %48, %47 : vector<32x128xf32>
    %cst_28 = arith.constant 1.000000e+00 : f32
    %50 = vector.broadcast %cst_28 : f32 to vector<32x128xf32>
    %51 = arith.divf %50, %49 : vector<32x128xf32>
    %cst_29 = arith.constant 1.06140542 : f32
    %52 = vector.broadcast %cst_29 : f32 to vector<32x128xf32>
    %53 = arith.mulf %52, %51 : vector<32x128xf32>
    %cst_30 = arith.constant -1.45315206 : f32
    %54 = vector.broadcast %cst_30 : f32 to vector<32x128xf32>
    %55 = arith.addf %53, %54 : vector<32x128xf32>
    %56 = arith.mulf %55, %51 : vector<32x128xf32>
    %cst_31 = arith.constant 1.42141378 : f32
    %57 = vector.broadcast %cst_31 : f32 to vector<32x128xf32>
    %58 = arith.addf %56, %57 : vector<32x128xf32>
    %59 = arith.mulf %58, %51 : vector<32x128xf32>
    %cst_32 = arith.constant -0.284496725 : f32
    %60 = vector.broadcast %cst_32 : f32 to vector<32x128xf32>
    %61 = arith.addf %59, %60 : vector<32x128xf32>
    %62 = arith.mulf %61, %51 : vector<32x128xf32>
    %cst_33 = arith.constant 0.254829586 : f32
    %63 = vector.broadcast %cst_33 : f32 to vector<32x128xf32>
    %64 = arith.addf %62, %63 : vector<32x128xf32>
    %65 = arith.mulf %64, %51 : vector<32x128xf32>
    %cst_34 = arith.constant 0.000000e+00 : f32
    %66 = vector.broadcast %cst_34 : f32 to vector<32x128xf32>
    %67 = arith.subf %66, %45 : vector<32x128xf32>
    %68 = arith.mulf %67, %45 : vector<32x128xf32>
    %69 = math.exp %68 : vector<32x128xf32>
    %70 = arith.mulf %65, %69 : vector<32x128xf32>
    %cst_35 = arith.constant 1.000000e+00 : f32
    %71 = vector.broadcast %cst_35 : f32 to vector<32x128xf32>
    %72 = arith.subf %71, %70 : vector<32x128xf32>
    %73 = arith.mulf %44, %72 : vector<32x128xf32>
    %cst_36 = arith.constant 1.000000e+00 : f32
    %74 = vector.broadcast %cst_36 : f32 to vector<32x128xf32>
    %75 = arith.addf %74, %73 : vector<32x128xf32>
    %76 = arith.mulf %37, %75 : vector<32x128xf32>
    %77 = arith.truncf %76 : vector<32x128xf32> to vector<32x128xbf16>
    %c0_37 = arith.constant 0 : index
    %c0_38 = arith.constant 0 : index
    %78 = vector.load %arg9[%c0_37, %c0_38] : memref<128x32xbf16, #tpu.memory_space<vmem>>, vector<128x32xbf16>
    %cst_39 = arith.constant dense<0.000000e+00> : vector<32x32xf32>
    %79 = tpu.matmul %77, %78, %cst_39 {dimension_numbers = #tpu.dot_dimension_numbers<[1], [0], [0], [1], [0, 0, 1, 1], [], []>} : vector<32x128xbf16>, vector<128x32xbf16>, vector<32x32xf32> -> vector<32x32xf32>
    %c0_40 = arith.constant 0 : index
    %c0_41 = arith.constant 0 : index
    %80 = vector.load %arg10[%c0_40, %c0_41] : memref<1x32xf32, #tpu.memory_space<vmem>>, vector<1x32xf32>
    %81 = vector.broadcast %80 : vector<1x32xf32> to vector<32x32xf32>
    %82 = arith.addf %79, %81 : vector<32x32xf32>
    %83 = arith.addf %7, %82 : vector<32x32xf32>
    %c0_42 = arith.constant 0 : index
    %c0_43 = arith.constant 0 : index
    %84 = vector.load %arg11[%c0_42, %c0_43] : memref<32x32xf32, #tpu.memory_space<vmem>>, vector<32x32xf32>
    tpu.vector_store %arg11[%c0_42, %c0_43], %83 {strides = array<i32>} : memref<32x32xf32, #tpu.memory_space<vmem>>, vector<32x32xf32>,
    return
  }
  func.func @transform_0(%arg0: i32) -> (i32, i32) {
    %c0_i32 = arith.constant 0 : i32
    %c0_i32_0 = arith.constant 0 : i32
    return %arg0, %c0_i32 : i32, i32
  }
  func.func @transform_1(%arg0: i32) -> (i32, i32) {
    %c0_i32 = arith.constant 0 : i32
    %c0_i32_0 = arith.constant 0 : i32
    return %arg0, %c0_i32 : i32, i32
  }
  func.func @transform_2(%arg0: i32) -> (i32, i32) {
    %c0_i32 = arith.constant 0 : i32
    %c0_i32_0 = arith.constant 0 : i32
    %c0_i32_1 = arith.constant 0 : i32
    return %c0_i32, %c0_i32_0 : i32, i32
  }
  func.func @transform_3(%arg0: i32) -> (i32, i32) {
    %c0_i32 = arith.constant 0 : i32
    %c0_i32_0 = arith.constant 0 : i32
    %c0_i32_1 = arith.constant 0 : i32
    return %c0_i32, %c0_i32_0 : i32, i32
  }
  func.func @transform_4(%arg0: i32) -> (i32, i32) {
    %c0_i32 = arith.constant 0 : i32
    %c0_i32_0 = arith.constant 0 : i32
    %c0_i32_1 = arith.constant 0 : i32
    return %c0_i32, %c0_i32_0 : i32, i32
  }
  func.func @transform_5(%arg0: i32) -> (i32, i32) {
    %c0_i32 = arith.constant 0 : i32
    %c0_i32_0 = arith.constant 0 : i32
    %c0_i32_1 = arith.constant 0 : i32
    return %c0_i32, %c0_i32_0 : i32, i32
  }
  func.func @transform_6(%arg0: i32) -> (i32, i32) {
    %c0_i32 = arith.constant 0 : i32
    %c0_i32_0 = arith.constant 0 : i32
    %c0_i32_1 = arith.constant 0 : i32
    return %c0_i32, %c0_i32_0 : i32, i32
  }
  func.func @transform_7(%arg0: i32) -> (i32, i32) {
    %c0_i32 = arith.constant 0 : i32
    %c0_i32_0 = arith.constant 0 : i32
    %c0_i32_1 = arith.constant 0 : i32
    return %c0_i32, %c0_i32_0 : i32, i32
  }
  func.func @transform_8(%arg0: i32) -> (i32, i32) {
    %c0_i32 = arith.constant 0 : i32
    %c0_i32_0 = arith.constant 0 : i32
    %c0_i32_1 = arith.constant 0 : i32
    return %c0_i32, %c0_i32_0 : i32, i32
  }
  func.func @transform_9(%arg0: i32) -> (i32, i32) {
    %c0_i32 = arith.constant 0 : i32
    %c0_i32_0 = arith.constant 0 : i32
    %c0_i32_1 = arith.constant 0 : i32
    return %c0_i32, %c0_i32_0 : i32, i32
  }
  func.func @transform_10(%arg0: i32) -> (i32, i32) {
    %c0_i32 = arith.constant 0 : i32
    %c0_i32_0 = arith.constant 0 : i32
    return %arg0, %c0_i32 : i32, i32
  }
}

module attributes {stable_mosaic.version = 11 : i64} {
  func.func @_head_kernel(%arg0: memref<2x2x32xf32, #tpu.memory_space<vmem>>, %arg1: memref<1x32xf32, #tpu.memory_space<vmem>>, %arg2: memref<1x32xf32, #tpu.memory_space<vmem>>, %arg3: memref<64x128xbf16, #tpu.memory_space<vmem>>, %arg4: memref<1x128xf32, #tpu.memory_space<vmem>>, %arg5: memref<2x128xf32, #tpu.memory_space<vmem>>) attributes {dimension_semantics = [], scalar_prefetch = 0 : i64, scratch_operands = 0 : i64, tpu.core_type = #tpu.core_type<tc>} {
    %c0 = arith.constant 0 : index
    %c0_0 = arith.constant 0 : index
    %c0_1 = arith.constant 0 : index
    %0 = vector.load %arg0[%c0, %c0_0, %c0_1] : memref<2x2x32xf32, #tpu.memory_space<vmem>>, vector<2x2x32xf32>
    %c0_2 = arith.constant 0 : index
    %c0_3 = arith.constant 0 : index
    %1 = vector.load %arg1[%c0_2, %c0_3] : memref<1x32xf32, #tpu.memory_space<vmem>>, vector<1x32xf32>
    %c0_4 = arith.constant 0 : index
    %c0_5 = arith.constant 0 : index
    %2 = vector.load %arg2[%c0_4, %c0_5] : memref<1x32xf32, #tpu.memory_space<vmem>>, vector<1x32xf32>
    %cst = arith.constant dense<0.000000e+00> : vector<2x2xf32>
    %3 = vector.multi_reduction <add>, %0, %cst [2] : vector<2x2x32xf32> to vector<2x2xf32>
    %4 = vector.shape_cast %3 : vector<2x2xf32> to vector<2x2x1xf32>
    %cst_6 = arith.constant 3.200000e+01 : f32
    %5 = vector.broadcast %cst_6 : f32 to vector<2x2x1xf32>
    %6 = arith.divf %4, %5 : vector<2x2x1xf32>
    %7 = vector.broadcast %6 : vector<2x2x1xf32> to vector<2x2x32xf32>
    %8 = arith.subf %0, %7 : vector<2x2x32xf32>
    %9 = arith.mulf %8, %8 : vector<2x2x32xf32>
    %cst_7 = arith.constant dense<0.000000e+00> : vector<2x2xf32>
    %10 = vector.multi_reduction <add>, %9, %cst_7 [2] : vector<2x2x32xf32> to vector<2x2xf32>
    %11 = vector.shape_cast %10 : vector<2x2xf32> to vector<2x2x1xf32>
    %cst_8 = arith.constant 3.200000e+01 : f32
    %12 = vector.broadcast %cst_8 : f32 to vector<2x2x1xf32>
    %13 = arith.divf %11, %12 : vector<2x2x1xf32>
    %cst_9 = arith.constant 9.99999996E-13 : f32
    %14 = vector.broadcast %cst_9 : f32 to vector<2x2x1xf32>
    %15 = arith.addf %13, %14 : vector<2x2x1xf32>
    %16 = math.rsqrt %15 : vector<2x2x1xf32>
    %17 = vector.broadcast %16 : vector<2x2x1xf32> to vector<2x2x32xf32>
    %18 = arith.mulf %8, %17 : vector<2x2x32xf32>
    %19 = vector.shape_cast %1 : vector<1x32xf32> to vector<1x1x32xf32>
    %20 = vector.broadcast %19 : vector<1x1x32xf32> to vector<2x2x32xf32>
    %21 = arith.mulf %18, %20 : vector<2x2x32xf32>
    %22 = vector.shape_cast %2 : vector<1x32xf32> to vector<1x1x32xf32>
    %23 = vector.broadcast %22 : vector<1x1x32xf32> to vector<2x2x32xf32>
    %24 = arith.addf %21, %23 : vector<2x2x32xf32>
    %25 = vector.extract_strided_slice %24 {offsets = [0, 0, 0], sizes = [2, 1, 32], strides = [1, 1, 1]} : vector<2x2x32xf32> to vector<2x1x32xf32>
    %26 = vector.shape_cast %25 : vector<2x1x32xf32> to vector<2x32xf32>
    %27 = vector.extract_strided_slice %24 {offsets = [0, 1, 0], sizes = [2, 1, 32], strides = [1, 1, 1]} : vector<2x2x32xf32> to vector<2x1x32xf32>
    %28 = vector.shape_cast %27 : vector<2x1x32xf32> to vector<2x32xf32>
    %29 = tpu.concatenate %26, %28 in 1 : vector<2x32xf32>, vector<2x32xf32> -> vector<2x64xf32>
    %30 = arith.truncf %29 : vector<2x64xf32> to vector<2x64xbf16>
    %c0_10 = arith.constant 0 : index
    %c0_11 = arith.constant 0 : index
    %31 = vector.load %arg3[%c0_10, %c0_11] : memref<64x128xbf16, #tpu.memory_space<vmem>>, vector<64x128xbf16>
    %cst_12 = arith.constant dense<0.000000e+00> : vector<2x128xf32>
    %32 = tpu.matmul %30, %31, %cst_12 {dimension_numbers = #tpu.dot_dimension_numbers<[1], [0], [0], [1], [0, 0, 1, 1], [], []>} : vector<2x64xbf16>, vector<64x128xbf16>, vector<2x128xf32> -> vector<2x128xf32>
    %c0_13 = arith.constant 0 : index
    %c0_14 = arith.constant 0 : index
    %33 = vector.load %arg4[%c0_13, %c0_14] : memref<1x128xf32, #tpu.memory_space<vmem>>, vector<1x128xf32>
    %34 = vector.broadcast %33 : vector<1x128xf32> to vector<2x128xf32>
    %35 = arith.addf %32, %34 : vector<2x128xf32>
    %c0_15 = arith.constant 0 : index
    %c0_16 = arith.constant 0 : index
    %36 = vector.load %arg5[%c0_15, %c0_16] : memref<2x128xf32, #tpu.memory_space<vmem>>, vector<2x128xf32>
    tpu.vector_store %arg5[%c0_15, %c0_16], %35 {strides = array<i32>} : memref<2x128xf32, #tpu.memory_space<vmem>>, vector<2x128xf32>,
    return
  }
}

</mosaic_0001>

<llo_original>
// kernel: student_ast_forward.8
$region0: #{student_ast_forward.8}
  #allocation0 [shape = 'u32[]', space=smem, size = 0x4, offset = 0x4, fixed_abs, tag = 'smem constant byte address 0x4 - core index']
  #allocation1 [shape = 'u32[144,128]{1,0:T(1,128)}', space=vmem, size = 0x12000, scoped, tag = 'internal scratch']
  %s0 = inlined_call_operand.vmem [shape: f32[16,16], index: 0, kind: input, shape index: {}]
  %s1 = inlined_call_operand.vmem [shape: bf16[16,32], index: 1, kind: input, shape index: {}]
  %s2 = inlined_call_operand.vmem [shape: f32[1,32], index: 2, kind: input, shape index: {}]
  %s3 = inlined_call_operand.vmem [shape: f32[16,32], index: 3, kind: output, shape index: {}]
  %s4 = sld [smem:[#allocation0]]
  $region22: #{student_ast_forward.8} parent=0
    _
  %s6 = ssub.s32 1, %s4
  %s7 = scalar_select 0, %s6, %s4
  // Predicated region
  $region2: #{student_ast_forward.8} parent=0 // pred_check
    _
  $region3: #{student_ast_forward.8} parent=0 // pred_check_branch
    %9 = sbr.rel (0) target = $region5
  $region4: #{student_ast_forward.8} parent=0 // pred_region
    _
  $region5: #{student_ast_forward.8} parent=0 // pred_fallthru
    _
  // Predicated region
  $region6: #{student_ast_forward.8} parent=0 // pred_check
    _
  $region7: #{student_ast_forward.8} parent=0 // pred_check_branch
    %11 = sbr.rel (0) target = $region9
  $region8: #{student_ast_forward.8} parent=0 // pred_region
    _
  $region9: #{student_ast_forward.8} parent=0 // pred_fallthru
    _
  // Predicated region
  $region10: #{student_ast_forward.8} parent=0 // pred_check
    _
  $region11: #{student_ast_forward.8} parent=0 // pred_check_branch
    %13 = sbr.rel (0) target = $region13
  $region12: #{student_ast_forward.8} parent=0 // pred_region
    _
  $region13: #{student_ast_forward.8} parent=0 // pred_fallthru
    _
  %v15 = vld [vmem:[%s0] sm:$0xff]
  %v16 = vld [vmem:[%s0 + $0x8] sm:$0xff]
  %v17 = vpack.c.bf16 %v16, %v15
  %v18 = vld [vmem:[%s1] sm:$0xf]
  %v19 = vld [vmem:[%s1 + $0x4] sm:$0xf]
  %v20 = vld [vmem:[%s2] sm:$0x1]
  %v22 = vlaneseq
  %v23 = vshrl.u32 %v22, 7
  %v24 = vsub.s32 0, %v23
  %v25 = vrot.slane %v20, %v24
  %v29 = vunpack.c.l.b16 %v18
  %v30 = vunpack.c.l.b16 %v19
  %v31 = vpack.c.b16 %v30, %v29
  %vm33 = vcmask 130048
  %v35 = vsel %vm33, %v17, 0
  %37 = vmatprep.subr.bf16.mxu0 0
  %38 = vmatpush1.bf16.msra.mxu0 %v31
  %39 = vmatprep.subr.bf16.mxu0 0
  %40 = vmatpush1.bf16.msra.mxu0 0
  %41 = vmatprep.subr.bf16.mxu0 0
  %42 = vmatpush1.bf16.msra.mxu0 0
  %43 = vmatprep.subr.bf16.mxu0 0
  %44 = vmatpush1.bf16.msra.mxu0 0
  %45 = vmatprep.subr.bf16.mxu0 0
  %46 = vmatpush1.bf16.msra.mxu0 0
  %47 = vmatprep.subr.bf16.mxu0 0
  %48 = vmatpush1.bf16.msra.mxu0 0
  %49 = vmatprep.subr.bf16.mxu0 0
  %50 = vmatpush1.bf16.msra.mxu0 0
  %51 = vmatprep.subr.bf16.mxu0 0
  %52 = vmatpush1.bf16.msra.mxu0 0
  %53 = vmatprep.subr.bf16.mxu0 0
  %54 = vmatpush1.bf16.msra.mxu0 0
  %55 = vmatprep.subr.bf16.mxu0 0
  %56 = vmatpush1.bf16.msra.mxu0 0
  %57 = vmatprep.subr.bf16.mxu0 0
  %58 = vmatpush1.bf16.msra.mxu0 0
  %59 = vmatprep.subr.bf16.mxu0 0
  %60 = vmatpush1.bf16.msra.mxu0 0
  %61 = vmatprep.subr.bf16.mxu0 0
  %62 = vmatpush1.bf16.msra.mxu0 0
  %63 = vmatprep.subr.bf16.mxu0 0
  %64 = vmatpush1.bf16.msra.mxu0 0
  %65 = vmatprep.subr.bf16.mxu0 0
  %66 = vmatpush1.bf16.msra.mxu0 0
  %67 = vmatprep.subr.bf16.mxu0 0
  %68 = vmatpush1.bf16.msra.mxu0 0
  %69 = vmatprep.mubr.bf16.mxu0 0
  %70 = vmatmul.mubr.bf16.gmra.mrb[0].mxu0 %v35
  %v71 = vpop.f32.mrb[0].mxu0
  %v72 = vadd.f32 %v25, %v71
  %v73 = vpop.f32.mrb[0].mxu0
  %v74 = vpop.f32.mrb[0].mxu0
  %v75 = vadd.f32 %v25, %v74
  %v76 = vpop.f32.mrb[0].mxu0
  %77 = vdwg.mxu0
  %vm78 = vcmask 261120
  %79 = vst.msk [vmem:[%s3] sm:$0xff] %vm78, %v72
  %80 = vst.msk [vmem:[%s3 + $0x8] sm:$0xff] %vm78, %v75
  // Predicated region
  $region14: #{student_ast_forward.8} parent=0 // pred_check
    _
  $region15: #{student_ast_forward.8} parent=0 // pred_check_branch
    %82 = sbr.rel (0) target = $region17
  $region16: #{student_ast_forward.8} parent=0 // pred_region
    _
  $region17: #{student_ast_forward.8} parent=0 // pred_fallthru
    _
  // Predicated region
  $region18: #{student_ast_forward.8} parent=0 // pred_check
    _
  $region19: #{student_ast_forward.8} parent=0 // pred_check_branch
    %84 = sbr.rel (0) target = $region21
  $region20: #{student_ast_forward.8} parent=0 // pred_region
    _
  $region21: #{student_ast_forward.8} parent=0 // pred_fallthru
    _

// kernel: student_ast_forward.10
$region0: #{student_ast_forward.10}
  #allocation0 [shape = 'u32[]', space=smem, size = 0x4, offset = 0x4, fixed_abs, tag = 'smem constant byte address 0x4 - core index']
  #allocation1 [shape = 'u32[144,128]{1,0:T(1,128)}', space=vmem, size = 0x12000, scoped, tag = 'internal scratch']
  %s0 = inlined_call_operand.vmem [shape: bf16[2,2,16,48], index: 0, kind: input, shape index: {}]
  %s1 = inlined_call_operand.vmem [shape: bf16[2,2,16,16], index: 1, kind: output, shape index: {}]
  %s2 = sld [smem:[#allocation0]]
  $region37: #{student_ast_forward.10} parent=0
    _
  %s4 = ssub.s32 1, %s2
  %s5 = scalar_select 0, %s4, %s2
  loop: start=0, step=1, limit=6
  $region2: #{student_ast_forward.10} parent=0 // loop_pre_header
    _
  $region3: #{student_ast_forward.10} parent=0 // loop_header
    %s7 = sphi 0, %s11
    %p8 = scmp.ge.s32.totalorder %s7, 6
    %s14 = sphi 0, %s26
    %s15 = sphi 0, %s22
    %s16 = sphi 0, %s14
    %s17 = sphi 0, %s15
    %s18 = sphi 0, %s16
    %s19 = sphi 0, %s17
    %s31 = sphi 0, %s33
    %s34 = sphi 0, %s31
    %s35 = sphi 0, %s34
    %s51 = sphi 0, %s35
    %s59 = sphi 0, %s61
    %s62 = sphi 0, %s59
    %s63 = sphi 0, %s62
    %s79 = sphi 0, %s63
  $region4: #{student_ast_forward.10} parent=0 // loop_header_branch
    %10 = sbr.rel (%p8) target = $region8
  $region5: #{student_ast_forward.10} parent=0 // loop_body
    %s12 = ssub.s32 %s7, 1
    %s13 = ssub.s32 %s7, 2
    %s20 = sadd.s32 1, %s15
    %p21 = scmp.ge.s32.totalorder %s20, 2
    %s22 = scalar_select %p21, 0, %s20
    %s23 = sadd.s32 1, %s14
    %s24 = scalar_select %p21, %s23, %s14
    %p25 = scmp.ge.s32.totalorder %s24, 2
    %s26 = scalar_select %p25, 0, %s24
    %s27 = ssub.s32 %s14, %s26
    %s28 = ssub.s32 %s15, %s22
    %s29 = sor.u32 %s27, %s28
    %p30 = scmp.eq.s32.totalorder %s29, 0
    %s32 = sadd.s32 %s31, 1
    %s33 = scalar_select %p30, %s31, %s32
    %p36 = pneg %p30
    %p37 = scmp.eq.s32.totalorder %s7, 3
    %p38 = por %p36, %p37
    %p39 = scmp.ne.s32.totalorder %s31, %s34
    %p40 = scmp.eq.s32.totalorder %s7, 0
    %p41 = por %p39, %p40
    %p42 = scmp.ne.s32.totalorder %s31, %s34
    %p43 = scmp.eq.s32.totalorder %s12, 3
    %p44 = por %p42, %p43
    %p45 = scmp.ne.s32.totalorder %s34, %s35
    %p46 = scmp.eq.s32.totalorder %s12, 0
    %p47 = por %p45, %p46
    %p48 = scmp.ne.s32.totalorder %s34, %s35
    %p49 = scmp.eq.s32.totalorder %s13, 3
    %p50 = por %p48, %p49
    %p52 = scmp.ne.s32.totalorder %s35, %s51
    %p53 = scmp.eq.s32.totalorder %s13, 0
    %p54 = por %p52, %p53
    %s55 = ssub.s32 %s14, %s26
    %s56 = ssub.s32 %s15, %s22
    %s57 = sor.u32 %s55, %s56
    %p58 = scmp.eq.s32.totalorder %s57, 0
    %s60 = sadd.s32 %s59, 1
    %s61 = scalar_select %p58, %s59, %s60
    %p64 = pneg %p58
    %p65 = scmp.eq.s32.totalorder %s7, 3
    %p66 = por %p64, %p65
    %p67 = scmp.ne.s32.totalorder %s59, %s62
    %p68 = scmp.eq.s32.totalorder %s7, 0
    %p69 = por %p67, %p68
    %p70 = scmp.ne.s32.totalorder %s59, %s62
    %p71 = scmp.eq.s32.totalorder %s12, 3
    %p72 = por %p70, %p71
    %p73 = scmp.ne.s32.totalorder %s62, %s63
    %p74 = scmp.eq.s32.totalorder %s12, 0
    %p75 = por %p73, %p74
    %p76 = scmp.ne.s32.totalorder %s62, %s63
    %p77 = scmp.eq.s32.totalorder %s13, 3
    %p78 = por %p76, %p77
    %p80 = scmp.ne.s32.totalorder %s63, %s79
    %p81 = scmp.eq.s32.totalorder %s13, 0
    %p82 = por %p80, %p81
    %p83 = scmp.le.s32.totalorder 1, %s7
    %p84 = scmp.lt.s32.totalorder %s7, 5
    %p85 = pnand %p83, %p84
    %p86 = pneg %p85
    // Predicated region
    $region9: #{student_ast_forward.10} parent=5 // pred_check
      _
    $region10: #{student_ast_forward.10} parent=5 // pred_check_branch
      %88 = sbr.rel (%p85) target = $region12
    $region11: #{student_ast_forward.10} parent=5 // pred_region
      %s89 = ssub.s32 %s7, 1
    $region12: #{student_ast_forward.10} parent=5 // pred_fallthru
      _
    %p90 = scmp.lt.s32.totalorder %s7, 4
    // Predicated region
    $region13: #{student_ast_forward.10} parent=5 // pred_check
      %p91 = pneg %p90
    $region14: #{student_ast_forward.10} parent=5 // pred_check_branch
      %93 = sbr.rel (%p91) target = $region16
    $region15: #{student_ast_forward.10} parent=5 // pred_region
      // Predicated region
      $region17: #{student_ast_forward.10} parent=15 // pred_check
        %p94 = pneg %p41
      $region18: #{student_ast_forward.10} parent=15 // pred_check_branch
        %96 = sbr.rel (%p94) target = $region20
      $region19: #{student_ast_forward.10} parent=15 // pred_region
        %p97 = scmp.lt.s32.totalorder %s14, 1
        %s98 = scalar_select %p97, %s14, 1
        %p99 = scmp.lt.s32.totalorder %s15, 1
        %s100 = scalar_select %p99, %s15, 1
        %s101 = smul.addr %s100, 2
        %s102 = smul.addr %s98, 4
        %s103 = sadd.s32 %s101, %s102
        %s104 = smul.addr %s103, 4
        %s105 = scalar_lea.vmem %s0, %s104
      $region20: #{student_ast_forward.10} parent=15 // pred_fallthru
        _
    $region16: #{student_ast_forward.10} parent=5 // pred_fallthru
      _
    %p106 = scmp.le.s32.totalorder 1, %s7
    %p107 = scmp.lt.s32.totalorder %s7, 5
    %p108 = pnand %p106, %p107
    %p109 = pneg %p108
    // Predicated region
    $region21: #{student_ast_forward.10} parent=5 // pred_check
      _
    $region22: #{student_ast_forward.10} parent=5 // pred_check_branch
      %111 = sbr.rel (%p108) target = $region24
    $region23: #{student_ast_forward.10} parent=5 // pred_region
      %s112 = ssub.s32 %s7, 1
      %p113 = scmp.lt.s32.totalorder %s16, 1
      %s114 = scalar_select %p113, %s16, 1
      %p115 = scmp.lt.s32.totalorder %s17, 1
      %s116 = scalar_select %p115, %s17, 1
      %s117 = smul.addr %s116, 2
      %s118 = smul.addr %s114, 4
      %s119 = sadd.s32 %s117, %s118
      %s120 = smul.addr %s119, 4
      %s121 = scalar_lea.vmem %s0, %s120
      %p122 = pneg %p47
      %p123 = pneg %p44
      %p124 = pneg %p75
      %p125 = pneg %p72
      %p126 = scmp.lt.s32.totalorder %s16, 1
      %s127 = scalar_select %p126, %s16, 1
      %p128 = scmp.lt.s32.totalorder %s17, 1
      %s129 = scalar_select %p128, %s17, 1
      %s130 = smul.addr %s129, 2
      %s131 = smul.addr %s127, 4
      %s132 = sadd.s32 %s130, %s131
      %s133 = smul.addr %s132, 4
      %s134 = scalar_lea.vmem %s1, %s133
      %p135 = scmp.lt.s32.totalorder %s16, 1
      %s136 = scalar_select %p135, %s16, 1
      %p137 = scmp.lt.s32.totalorder %s17, 1
      %s138 = scalar_select %p137, %s17, 1
      %s139 = smul.addr %s138, 2
      %s140 = smul.addr %s136, 4
      %s141 = sadd.s32 %s139, %s140
      %s142 = smul.addr %s141, 4
      %s143 = scalar_lea.vmem %s0, %s142
      %p144 = scmp.lt.s32.totalorder %s16, 1
      %s145 = scalar_select %p144, %s16, 1
      %p146 = scmp.lt.s32.totalorder %s17, 1
      %s147 = scalar_select %p146, %s17, 1
      %s148 = smul.addr %s147, 2
      %s149 = smul.addr %s145, 4
      %s150 = sadd.s32 %s148, %s149
      %s151 = smul.addr %s150, 4
      %s152 = scalar_lea.vmem %s1, %s151
      %v154 = vld [vmem:[%s143] sm:$0xf]
      %v155 = vld [vmem:[%s143 + $0x4] sm:$0xf]
      %v158 = vunpack.c.l.b16 %v154
      %v159 = vunpack.c.l.b16 %v155
      %v160 = vpack.c.b16 %v159, %v158
      %161 = vrot.lane.b32.xlu0 %v160, 112
      %v162 = vpop.permute.xlu0 %161
      %vm163 = vcmask 130048
      %v165 = vsel %vm163, %v160, 0
      %v168 = vsel %vm163, %v162, 0
      %170 = vmatprep.subr.bf16.mxu0 0
      %171 = vmatpush1.bf16.xpose.msra.mxu0 %v168
      %172 = vmatprep.subr.bf16.mxu0 0
      %173 = vmatpush1.bf16.xpose.msra.mxu0 0
      %174 = vmatprep.subr.bf16.mxu0 0
      %175 = vmatpush1.bf16.xpose.msra.mxu0 0
      %176 = vmatprep.subr.bf16.mxu0 0
      %177 = vmatpush1.bf16.xpose.msra.mxu0 0
      %178 = vmatprep.subr.bf16.mxu0 0
      %179 = vmatpush1.bf16.xpose.msra.mxu0 0
      %180 = vmatprep.subr.bf16.mxu0 0
      %181 = vmatpush1.bf16.xpose.msra.mxu0 0
      %182 = vmatprep.subr.bf16.mxu0 0
      %183 = vmatpush1.bf16.xpose.msra.mxu0 0
      %184 = vmatprep.subr.bf16.mxu0 0
      %185 = vmatpush1.bf16.xpose.msra.mxu0 0
      %186 = vmatprep.subr.bf16.mxu0 0
      %187 = vmatpush1.bf16.xpose.msra.mxu0 0
      %188 = vmatprep.subr.bf16.mxu0 0
      %189 = vmatpush1.bf16.xpose.msra.mxu0 0
      %190 = vmatprep.subr.bf16.mxu0 0
      %191 = vmatpush1.bf16.xpose.msra.mxu0 0
      %192 = vmatprep.subr.bf16.mxu0 0
      %193 = vmatpush1.bf16.xpose.msra.mxu0 0
      %194 = vmatprep.subr.bf16.mxu0 0
      %195 = vmatpush1.bf16.xpose.msra.mxu0 0
      %196 = vmatprep.subr.bf16.mxu0 0
      %197 = vmatpush1.bf16.xpose.msra.mxu0 0
      %198 = vmatprep.subr.bf16.mxu0 0
      %199 = vmatpush1.bf16.xpose.msra.mxu0 0
      %200 = vmatprep.subr.bf16.mxu0 0
      %201 = vmatpush1.bf16.xpose.msra.mxu0 0
      %202 = vmatprep.mubr.bf16.mxu0 0
      %203 = vmatmul.mubr.bf16.gmra.mrb[0].mxu0 %v165
      %v204 = vpop.f32.mrb[0].mxu0
      %v205 = vadd.f32 0.0, %v204
      %v206 = vpop.f32.mrb[0].mxu0
      %v207 = vpop.f32.mrb[0].mxu0
      %v208 = vadd.f32 0.0, %v207
      %v209 = vpop.f32.mrb[0].mxu0
      %210 = vdwg.mxu0
      %v211 = vlaneseq
      %v212 = vand.u32 %v211, 127
      %vm213 = vcmp.lt.s32.totalorder %v212, 10
      %v214 = vsel %vm213, %v205, -1e+30
      %v215 = vsel %vm213, %v208, -1e+30
      %v216 = vsel %vm163, %v214, -inf
      %217 = vmax.xlane.f32.xlu0 %v216
      %v218 = vpop.xlane.xlu0 %217
      %v219 = vsel %vm163, %v215, -inf
      %220 = vmax.xlane.f32.xlu0 %v219
      %v221 = vpop.xlane.xlu0 %220
      %v222 = vsub.f32 %v214, %v218
      %v223 = vsub.f32 %v215, %v221
      %v224 = vmul.f32 %v222, 1.442695
      %v225 = vpow.pop %v224
      %v226 = vmul.f32 %v223, 1.442695
      %v227 = vpow.pop %v226
      %v228 = vsel %vm163, %v225, 0.0
      %229 = vadd.xlane.f32.xlu0 %v228
      %v230 = vpop.xlane.xlu0 %229
      %v231 = vsel %vm163, %v227, 0.0
      %232 = vadd.xlane.f32.xlu0 %v231
      %v233 = vpop.xlane.xlu0 %232
      %v234 = vrcp.pop %v230
      %v235 = vmul.f32 1.0, %v234
      %v236 = vrcp.pop %v233
      %v237 = vmul.f32 1.0, %v236
      %v238 = vmul.f32 %v225, %v235
      %v239 = vmul.f32 %v227, %v237
      %v240 = vpack.c.bf16 %v239, %v238
      %241 = vrot.lane.b32.xlu0 %v160, 96
      %v242 = vpop.permute.xlu0 %241
      %v245 = vsel %vm163, %v240, 0
      %247 = vmatprep.subr.bf16.mxu0 0
      %248 = vmatpush1.bf16.msra.mxu0 %v242
      %249 = vmatprep.subr.bf16.mxu0 0
      %250 = vmatpush1.bf16.msra.mxu0 0
      %251 = vmatprep.subr.bf16.mxu0 0
      %252 = vmatpush1.bf16.msra.mxu0 0
      %253 = vmatprep.subr.bf16.mxu0 0
      %254 = vmatpush1.bf16.msra.mxu0 0
      %255 = vmatprep.subr.bf16.mxu0 0
      %256 = vmatpush1.bf16.msra.mxu0 0
      %257 = vmatprep.subr.bf16.mxu0 0
      %258 = vmatpush1.bf16.msra.mxu0 0
      %259 = vmatprep.subr.bf16.mxu0 0
      %260 = vmatpush1.bf16.msra.mxu0 0
      %261 = vmatprep.subr.bf16.mxu0 0
      %262 = vmatpush1.bf16.msra.mxu0 0
      %263 = vmatprep.subr.bf16.mxu0 0
      %264 = vmatpush1.bf16.msra.mxu0 0
      %265 = vmatprep.subr.bf16.mxu0 0
      %266 = vmatpush1.bf16.msra.mxu0 0
      %267 = vmatprep.subr.bf16.mxu0 0
      %268 = vmatpush1.bf16.msra.mxu0 0
      %269 = vmatprep.subr.bf16.mxu0 0
      %270 = vmatpush1.bf16.msra.mxu0 0
      %271 = vmatprep.subr.bf16.mxu0 0
      %272 = vmatpush1.bf16.msra.mxu0 0
      %273 = vmatprep.subr.bf16.mxu0 0
      %274 = vmatpush1.bf16.msra.mxu0 0
      %275 = vmatprep.subr.bf16.mxu0 0
      %276 = vmatpush1.bf16.msra.mxu0 0
      %277 = vmatprep.subr.bf16.mxu0 0
      %278 = vmatpush1.bf16.msra.mxu0 0
      %279 = vmatprep.mubr.bf16.mxu0 0
      %280 = vmatmul.mubr.bf16.gmra.mrb[0].mxu0 %v245
      %v281 = vpop.f32.mrb[0].mxu0
      %v282 = vadd.f32 0.0, %v281
      %v283 = vpop.f32.mrb[0].mxu0
      %v284 = vpop.f32.mrb[0].mxu0
      %v285 = vadd.f32 0.0, %v284
      %v286 = vpop.f32.mrb[0].mxu0
      %287 = vdwg.mxu0
      %v288 = vpack.c.bf16 %v285, %v282
      %v290 = vunpack.c.l.b16 %v288
      %v291 = vunpack.c.h.b16 %v288
      %v292 = vpack.c.b16 %v290, %v290
      %v293 = vpack.c.b16 %v291, %v291
      %vm296 = vcmask 125952
      %297 = vst.msk [vmem:[%s152] sm:$0xf] %vm296, %v292
      %298 = vst.msk [vmem:[%s152 + $0x4] sm:$0xf] %vm296, %v293
      %p299 = scmp.lt.s32.totalorder %s16, 1
      %s300 = scalar_select %p299, %s16, 1
      %p301 = scmp.lt.s32.totalorder %s17, 1
      %s302 = scalar_select %p301, %s17, 1
      %s303 = smul.addr %s302, 2
      %s304 = smul.addr %s300, 4
      %s305 = sadd.s32 %s303, %s304
      %s306 = smul.addr %s305, 4
      %s307 = scalar_lea.vmem %s1, %s306
      // Predicated region
      $region25: #{student_ast_forward.10} parent=23 // pred_check
        %p308 = pneg %p72
      $region26: #{student_ast_forward.10} parent=23 // pred_check_branch
        %310 = sbr.rel (%p308) target = $region28
      $region27: #{student_ast_forward.10} parent=23 // pred_region
        _
      $region28: #{student_ast_forward.10} parent=23 // pred_fallthru
        _
    $region24: #{student_ast_forward.10} parent=5 // pred_fallthru
      _
    %p311 = scmp.le.s32.totalorder 2, %s7
    // Predicated region
    $region29: #{student_ast_forward.10} parent=5 // pred_check
      %p312 = pneg %p311
    $region30: #{student_ast_forward.10} parent=5 // pred_check_branch
      %314 = sbr.rel (%p312) target = $region32
    $region31: #{student_ast_forward.10} parent=5 // pred_region
      %s315 = ssub.s32 %s7, 2
      // Predicated region
      $region33: #{student_ast_forward.10} parent=31 // pred_check
        %p316 = pneg %p78
      $region34: #{student_ast_forward.10} parent=31 // pred_check_branch
        %318 = sbr.rel (%p316) target = $region36
      $region35: #{student_ast_forward.10} parent=31 // pred_region
        %p319 = scmp.lt.s32.totalorder %s18, 1
        %s320 = scalar_select %p319, %s18, 1
        %p321 = scmp.lt.s32.totalorder %s19, 1
        %s322 = scalar_select %p321, %s19, 1
        %s323 = smul.addr %s322, 2
        %s324 = smul.addr %s320, 4
        %s325 = sadd.s32 %s323, %s324
        %s326 = smul.addr %s325, 4
        %s327 = scalar_lea.vmem %s1, %s326
      $region36: #{student_ast_forward.10} parent=31 // pred_fallthru
        _
    $region32: #{student_ast_forward.10} parent=5 // pred_fallthru
      _
  $region6: #{student_ast_forward.10} parent=0 // loop_footer
    %s11 = sadd.s32 1, %s7
  $region7: #{student_ast_forward.10} parent=0 // loop_footer_branch
    %6 = sbr.rel target = $region3
  $region8: #{student_ast_forward.10} parent=0 // loop_exit
    _

// kernel: student_ast_forward.9
$region0: #{student_ast_forward.9}
  #allocation0 [shape = 'u32[]', space=smem, size = 0x4, offset = 0x4, fixed_abs, tag = 'smem constant byte address 0x4 - core index']
  #allocation1 [shape = 'u32[144,128]{1,0:T(1,128)}', space=vmem, size = 0x12000, scoped, tag = 'internal scratch']
  %s0 = inlined_call_operand.vmem [shape: f32[32,32], index: 0, kind: input, shape index: {}]
  %s1 = inlined_call_operand.vmem [shape: f32[1,32], index: 1, kind: input, shape index: {}]
  %s2 = inlined_call_operand.vmem [shape: f32[1,32], index: 2, kind: input, shape index: {}]
  %s3 = inlined_call_operand.vmem [shape: bf16[32,96], index: 3, kind: input, shape index: {}]
  %s4 = inlined_call_operand.vmem [shape: f32[1,96], index: 4, kind: input, shape index: {}]
  %s5 = inlined_call_operand.vmem [shape: bf16[32,96], index: 5, kind: output, shape index: {}]
  %s6 = sld [smem:[#allocation0]]
  $region30: #{student_ast_forward.9} parent=0
    _
  %s8 = ssub.s32 1, %s6
  %s9 = scalar_select 0, %s8, %s6
  // Predicated region
  $region2: #{student_ast_forward.9} parent=0 // pred_check
    _
  $region3: #{student_ast_forward.9} parent=0 // pred_check_branch
    %11 = sbr.rel (0) target = $region5
  $region4: #{student_ast_forward.9} parent=0 // pred_region
    _
  $region5: #{student_ast_forward.9} parent=0 // pred_fallthru
    _
  // Predicated region
  $region6: #{student_ast_forward.9} parent=0 // pred_check
    _
  $region7: #{student_ast_forward.9} parent=0 // pred_check_branch
    %13 = sbr.rel (0) target = $region9
  $region8: #{student_ast_forward.9} parent=0 // pred_region
    _
  $region9: #{student_ast_forward.9} parent=0 // pred_fallthru
    _
  // Predicated region
  $region10: #{student_ast_forward.9} parent=0 // pred_check
    _
  $region11: #{student_ast_forward.9} parent=0 // pred_check_branch
    %15 = sbr.rel (0) target = $region13
  $region12: #{student_ast_forward.9} parent=0 // pred_region
    _
  $region13: #{student_ast_forward.9} parent=0 // pred_fallthru
    _
  // Predicated region
  $region14: #{student_ast_forward.9} parent=0 // pred_check
    _
  $region15: #{student_ast_forward.9} parent=0 // pred_check_branch
    %17 = sbr.rel (0) target = $region17
  $region16: #{student_ast_forward.9} parent=0 // pred_region
    _
  $region17: #{student_ast_forward.9} parent=0 // pred_fallthru
    _
  // Predicated region
  $region18: #{student_ast_forward.9} parent=0 // pred_check
    _
  $region19: #{student_ast_forward.9} parent=0 // pred_check_branch
    %19 = sbr.rel (0) target = $region21
  $region20: #{student_ast_forward.9} parent=0 // pred_region
    _
  $region21: #{student_ast_forward.9} parent=0 // pred_fallthru
    _
  %v21 = vld [vmem:[%s0] sm:$0xff]
  %v22 = vld [vmem:[%s0 + $0x8] sm:$0xff]
  %v23 = vld [vmem:[%s0 + $0x10] sm:$0xff]
  %v24 = vld [vmem:[%s0 + $0x18] sm:$0xff]
  %v25 = vld [vmem:[%s1] sm:$0x1]
  %v26 = vld [vmem:[%s2] sm:$0x1]
  %vm27 = vcmask 261120
  %v28 = vsel %vm27, %v21, 0.0
  %29 = vadd.xlane.f32.xlu0 %v28
  %v30 = vpop.xlane.xlu0 %29
  %v31 = vsel %vm27, %v22, 0.0
  %32 = vadd.xlane.f32.xlu0 %v31
  %v33 = vpop.xlane.xlu0 %32
  %v34 = vsel %vm27, %v23, 0.0
  %35 = vadd.xlane.f32.xlu0 %v34
  %v36 = vpop.xlane.xlu0 %35
  %v37 = vsel %vm27, %v24, 0.0
  %38 = vadd.xlane.f32.xlu0 %v37
  %v39 = vpop.xlane.xlu0 %38
  %v40 = vrcp.pop 32.0
  %v41 = vmul.f32 %v30, %v40
  %v42 = vmul.f32 %v33, %v40
  %v43 = vmul.f32 %v36, %v40
  %v44 = vmul.f32 %v39, %v40
  %v45 = vsub.f32 %v21, %v41
  %v46 = vsub.f32 %v22, %v42
  %v47 = vsub.f32 %v23, %v43
  %v48 = vsub.f32 %v24, %v44
  %v49 = vmul.f32 %v45, %v45
  %v50 = vmul.f32 %v46, %v46
  %v51 = vmul.f32 %v47, %v47
  %v52 = vmul.f32 %v48, %v48
  %v53 = vsel %vm27, %v49, 0.0
  %54 = vadd.xlane.f32.xlu0 %v53
  %v55 = vpop.xlane.xlu0 %54
  %v56 = vsel %vm27, %v50, 0.0
  %57 = vadd.xlane.f32.xlu0 %v56
  %v58 = vpop.xlane.xlu0 %57
  %v59 = vsel %vm27, %v51, 0.0
  %60 = vadd.xlane.f32.xlu0 %v59
  %v61 = vpop.xlane.xlu0 %60
  %v62 = vsel %vm27, %v52, 0.0
  %63 = vadd.xlane.f32.xlu0 %v62
  %v64 = vpop.xlane.xlu0 %63
  %v65 = vmul.f32 %v55, %v40
  %v66 = vmul.f32 %v58, %v40
  %v67 = vmul.f32 %v61, %v40
  %v68 = vmul.f32 %v64, %v40
  %v69 = vadd.f32 %v65, 1e-12
  %v70 = vadd.f32 %v66, 1e-12
  %v71 = vadd.f32 %v67, 1e-12
  %v72 = vadd.f32 %v68, 1e-12
  %v73 = vrsqrt.pop %v69
  %v74 = vrsqrt.pop %v70
  %v75 = vrsqrt.pop %v71
  %v76 = vrsqrt.pop %v72
  %v77 = vmul.f32 %v45, %v73
  %v78 = vmul.f32 %v46, %v74
  %v79 = vmul.f32 %v47, %v75
  %v80 = vmul.f32 %v48, %v76
  %v82 = vlaneseq
  %v83 = vshrl.u32 %v82, 7
  %v84 = vsub.s32 0, %v83
  %v85 = vrot.slane %v25, %v84
  %v87 = vmul.f32 %v77, %v85
  %v88 = vmul.f32 %v78, %v85
  %v89 = vmul.f32 %v79, %v85
  %v90 = vmul.f32 %v80, %v85
  %v92 = vlaneseq
  %v93 = vshrl.u32 %v92, 7
  %v94 = vsub.s32 0, %v93
  %v95 = vrot.slane %v26, %v94
  %v97 = vadd.f32 %v87, %v95
  %v98 = vadd.f32 %v88, %v95
  %v99 = vadd.f32 %v89, %v95
  %v100 = vadd.f32 %v90, %v95
  %v101 = vpack.c.bf16 %v98, %v97
  %v102 = vpack.c.bf16 %v100, %v99
  %v103 = vld [vmem:[%s3] sm:$0xf]
  %v104 = vld [vmem:[%s3 + $0x4] sm:$0xf]
  %v105 = vld [vmem:[%s3 + $0x8] sm:$0xf]
  %v106 = vld [vmem:[%s3 + $0xc] sm:$0xf]
  %v107 = vld [vmem:[%s4] sm:$0x1]
  %v109 = vlaneseq
  %v110 = vshrl.u32 %v109, 7
  %v111 = vsub.s32 0, %v110
  %v112 = vrot.slane %v107, %v111
  %v118 = vunpack.c.l.b16 %v103
  %v119 = vunpack.c.l.b16 %v104
  %v120 = vunpack.c.l.b16 %v105
  %v121 = vunpack.c.l.b16 %v106
  %v122 = vpack.c.b16 %v119, %v118
  %v123 = vpack.c.b16 %v121, %v120
  %v127 = vsel %vm27, %v101, 0
  %v130 = vsel %vm27, %v102, 0
  %132 = vmatprep.subr.bf16.mxu0 0
  %133 = vmatpush1.bf16.msra.mxu0 %v122
  %134 = vmatprep.subr.bf16.mxu0 0
  %135 = vmatpush1.bf16.msra.mxu0 %v123
  %136 = vmatprep.subr.bf16.mxu0 0
  %137 = vmatpush1.bf16.msra.mxu0 0
  %138 = vmatprep.subr.bf16.mxu0 0
  %139 = vmatpush1.bf16.msra.mxu0 0
  %140 = vmatprep.subr.bf16.mxu0 0
  %141 = vmatpush1.bf16.msra.mxu0 0
  %142 = vmatprep.subr.bf16.mxu0 0
  %143 = vmatpush1.bf16.msra.mxu0 0
  %144 = vmatprep.subr.bf16.mxu0 0
  %145 = vmatpush1.bf16.msra.mxu0 0
  %146 = vmatprep.subr.bf16.mxu0 0
  %147 = vmatpush1.bf16.msra.mxu0 0
  %148 = vmatprep.subr.bf16.mxu0 0
  %149 = vmatpush1.bf16.msra.mxu0 0
  %150 = vmatprep.subr.bf16.mxu0 0
  %151 = vmatpush1.bf16.msra.mxu0 0
  %152 = vmatprep.subr.bf16.mxu0 0
  %153 = vmatpush1.bf16.msra.mxu0 0
  %154 = vmatprep.subr.bf16.mxu0 0
  %155 = vmatpush1.bf16.msra.mxu0 0
  %156 = vmatprep.subr.bf16.mxu0 0
  %157 = vmatpush1.bf16.msra.mxu0 0
  %158 = vmatprep.subr.bf16.mxu0 0
  %159 = vmatpush1.bf16.msra.mxu0 0
  %160 = vmatprep.subr.bf16.mxu0 0
  %161 = vmatpush1.bf16.msra.mxu0 0
  %162 = vmatprep.subr.bf16.mxu0 0
  %163 = vmatpush1.bf16.msra.mxu0 0
  %164 = vmatprep.mubr.bf16.mxu0 0
  %165 = vmatmul.mubr.bf16.gmra.mrb[0].mxu0 %v127
  %v166 = vpop.f32.mrb[0].mxu0
  %v167 = vadd.f32 %v112, %v166
  %v168 = vpop.f32.mrb[0].mxu0
  %v169 = vpop.f32.mrb[0].mxu0
  %v170 = vadd.f32 %v112, %v169
  %v171 = vpop.f32.mrb[0].mxu0
  %172 = vmatprep.mubr.bf16.mxu0 0
  %173 = vmatmul.mubr.bf16.gmra.mrb[0].mxu0 %v130
  %v174 = vpop.f32.mrb[0].mxu0
  %v175 = vadd.f32 %v112, %v174
  %v176 = vpop.f32.mrb[0].mxu0
  %v177 = vpop.f32.mrb[0].mxu0
  %v178 = vadd.f32 %v112, %v177
  %v179 = vpop.f32.mrb[0].mxu0
  %180 = vdwg.mxu0
  %v181 = vpack.c.bf16 %v170, %v167
  %v182 = vpack.c.bf16 %v178, %v175
  %v185 = vunpack.c.l.b16 %v181
  %v186 = vunpack.c.h.b16 %v181
  %v187 = vunpack.c.l.b16 %v182
  %v188 = vunpack.c.h.b16 %v182
  %v189 = vpack.c.b16 %v185, %v185
  %v190 = vpack.c.b16 %v186, %v186
  %v191 = vpack.c.b16 %v187, %v187
  %v192 = vpack.c.b16 %v188, %v188
  %vm197 = vcmask 781312
  %198 = vst.msk [vmem:[%s5] sm:$0xf] %vm197, %v189
  %199 = vst.msk [vmem:[%s5 + $0x4] sm:$0xf] %vm197, %v190
  %200 = vst.msk [vmem:[%s5 + $0x8] sm:$0xf] %vm197, %v191
  %201 = vst.msk [vmem:[%s5 + $0xc] sm:$0xf] %vm197, %v192
  // Predicated region
  $region22: #{student_ast_forward.9} parent=0 // pred_check
    _
  $region23: #{student_ast_forward.9} parent=0 // pred_check_branch
    %203 = sbr.rel (0) target = $region25
  $region24: #{student_ast_forward.9} parent=0 // pred_region
    _
  $region25: #{student_ast_forward.9} parent=0 // pred_fallthru
    _
  // Predicated region
  $region26: #{student_ast_forward.9} parent=0 // pred_check
    _
  $region27: #{student_ast_forward.9} parent=0 // pred_check_branch
    %205 = sbr.rel (0) target = $region29
  $region28: #{student_ast_forward.9} parent=0 // pred_region
    _
  $region29: #{student_ast_forward.9} parent=0 // pred_fallthru
    _

// kernel: student_ast_forward.11
$region0: #{student_ast_forward.11}
  #allocation0 [shape = 'u32[]', space=smem, size = 0x4, offset = 0x4, fixed_abs, tag = 'smem constant byte address 0x4 - core index']
  #allocation1 [shape = 'u32[144,128]{1,0:T(1,128)}', space=vmem, size = 0x12000, scoped, tag = 'internal scratch']
  %s0 = inlined_call_operand.vmem [shape: bf16[32,32], index: 0, kind: input, shape index: {}]
  %s1 = inlined_call_operand.vmem [shape: f32[32,32], index: 1, kind: input, shape index: {}]
  %s2 = inlined_call_operand.vmem [shape: bf16[32,32], index: 2, kind: input, shape index: {}]
  %s3 = inlined_call_operand.vmem [shape: f32[1,32], index: 3, kind: input, shape index: {}]
  %s4 = inlined_call_operand.vmem [shape: f32[1,32], index: 4, kind: input, shape index: {}]
  %s5 = inlined_call_operand.vmem [shape: f32[1,32], index: 5, kind: input, shape index: {}]
  %s6 = inlined_call_operand.vmem [shape: bf16[32,128], index: 6, kind: input, shape index: {}]
  %s7 = inlined_call_operand.vmem [shape: f32[1,128], index: 7, kind: input, shape index: {}]
  %s8 = inlined_call_operand.vmem [shape: bf16[128,32], index: 8, kind: input, shape index: {}]
  %s9 = inlined_call_operand.vmem [shape: f32[1,32], index: 9, kind: input, shape index: {}]
  %s10 = inlined_call_operand.vmem [shape: f32[32,32], index: 10, kind: output, shape index: {}]
  %s11 = sld [smem:[#allocation0]]
  $region50: #{student_ast_forward.11} parent=0
    _
  %s13 = ssub.s32 1, %s11
  %s14 = scalar_select 0, %s13, %s11
  // Predicated region
  $region2: #{student_ast_forward.11} parent=0 // pred_check
    _
  $region3: #{student_ast_forward.11} parent=0 // pred_check_branch
    %16 = sbr.rel (0) target = $region5
  $region4: #{student_ast_forward.11} parent=0 // pred_region
    _
  $region5: #{student_ast_forward.11} parent=0 // pred_fallthru
    _
  // Predicated region
  $region6: #{student_ast_forward.11} parent=0 // pred_check
    _
  $region7: #{student_ast_forward.11} parent=0 // pred_check_branch
    %18 = sbr.rel (0) target = $region9
  $region8: #{student_ast_forward.11} parent=0 // pred_region
    _
  $region9: #{student_ast_forward.11} parent=0 // pred_fallthru
    _
  // Predicated region
  $region10: #{student_ast_forward.11} parent=0 // pred_check
    _
  $region11: #{student_ast_forward.11} parent=0 // pred_check_branch
    %20 = sbr.rel (0) target = $region13
  $region12: #{student_ast_forward.11} parent=0 // pred_region
    _
  $region13: #{student_ast_forward.11} parent=0 // pred_fallthru
    _
  // Predicated region
  $region14: #{student_ast_forward.11} parent=0 // pred_check
    _
  $region15: #{student_ast_forward.11} parent=0 // pred_check_branch
    %22 = sbr.rel (0) target = $region17
  $region16: #{student_ast_forward.11} parent=0 // pred_region
    _
  $region17: #{student_ast_forward.11} parent=0 // pred_fallthru
    _
  // Predicated region
  $region18: #{student_ast_forward.11} parent=0 // pred_check
    _
  $region19: #{student_ast_forward.11} parent=0 // pred_check_branch
    %24 = sbr.rel (0) target = $region21
  $region20: #{student_ast_forward.11} parent=0 // pred_region
    _
  $region21: #{student_ast_forward.11} parent=0 // pred_fallthru
    _
  // Predicated region
  $region22: #{student_ast_forward.11} parent=0 // pred_check
    _
  $region23: #{student_ast_forward.11} parent=0 // pred_check_branch
    %26 = sbr.rel (0) target = $region25
  $region24: #{student_ast_forward.11} parent=0 // pred_region
    _
  $region25: #{student_ast_forward.11} parent=0 // pred_fallthru
    _
  // Predicated region
  $region26: #{student_ast_forward.11} parent=0 // pred_check
    _
  $region27: #{student_ast_forward.11} parent=0 // pred_check_branch
    %28 = sbr.rel (0) target = $region29
  $region28: #{student_ast_forward.11} parent=0 // pred_region
    _
  $region29: #{student_ast_forward.11} parent=0 // pred_fallthru
    _
  // Predicated region
  $region30: #{student_ast_forward.11} parent=0 // pred_check
    _
  $region31: #{student_ast_forward.11} parent=0 // pred_check_branch
    %30 = sbr.rel (0) target = $region33
  $region32: #{student_ast_forward.11} parent=0 // pred_region
    _
  $region33: #{student_ast_forward.11} parent=0 // pred_fallthru
    _
  // Predicated region
  $region34: #{student_ast_forward.11} parent=0 // pred_check
    _
  $region35: #{student_ast_forward.11} parent=0 // pred_check_branch
    %32 = sbr.rel (0) target = $region37
  $region36: #{student_ast_forward.11} parent=0 // pred_region
    _
  $region37: #{student_ast_forward.11} parent=0 // pred_fallthru
    _
  // Predicated region
  $region38: #{student_ast_forward.11} parent=0 // pred_check
    _
  $region39: #{student_ast_forward.11} parent=0 // pred_check_branch
    %34 = sbr.rel (0) target = $region41
  $region40: #{student_ast_forward.11} parent=0 // pred_region
    _
  $region41: #{student_ast_forward.11} parent=0 // pred_fallthru
    _
  %v36 = vld [vmem:[%s1] sm:$0xff]
  %v37 = vld [vmem:[%s1 + $0x8] sm:$0xff]
  %v38 = vld [vmem:[%s1 + $0x10] sm:$0xff]
  %v39 = vld [vmem:[%s1 + $0x18] sm:$0xff]
  %v40 = vld [vmem:[%s0] sm:$0xf]
  %v41 = vld [vmem:[%s0 + $0x4] sm:$0xf]
  %v42 = vld [vmem:[%s0 + $0x8] sm:$0xf]
  %v43 = vld [vmem:[%s0 + $0xc] sm:$0xf]
  %v44 = vld [vmem:[%s2] sm:$0xf]
  %v45 = vld [vmem:[%s2 + $0x4] sm:$0xf]
  %v46 = vld [vmem:[%s2 + $0x8] sm:$0xf]
  %v47 = vld [vmem:[%s2 + $0xc] sm:$0xf]
  %v48 = vld [vmem:[%s3] sm:$0x1]
  %v50 = vlaneseq
  %v51 = vshrl.u32 %v50, 7
  %v52 = vsub.s32 0, %v51
  %v53 = vrot.slane %v48, %v52
  %v59 = vunpack.c.l.b16 %v40
  %v60 = vunpack.c.l.b16 %v41
  %v61 = vunpack.c.l.b16 %v42
  %v62 = vunpack.c.l.b16 %v43
  %v63 = vpack.c.b16 %v60, %v59
  %v64 = vpack.c.b16 %v62, %v61
  %v69 = vunpack.c.l.b16 %v44
  %v70 = vunpack.c.l.b16 %v45
  %v71 = vunpack.c.l.b16 %v46
  %v72 = vunpack.c.l.b16 %v47
  %v73 = vpack.c.b16 %v70, %v69
  %v74 = vpack.c.b16 %v72, %v71
  %vm77 = vcmask 261120
  %v79 = vsel %vm77, %v63, 0
  %v82 = vsel %vm77, %v64, 0
  %84 = vmatprep.subr.bf16.mxu0 0
  %85 = vmatpush1.bf16.msra.mxu0 %v73
  %86 = vmatprep.subr.bf16.mxu0 0
  %87 = vmatpush1.bf16.msra.mxu0 %v74
  %88 = vmatprep.subr.bf16.mxu0 0
  %89 = vmatpush1.bf16.msra.mxu0 0
  %90 = vmatprep.subr.bf16.mxu0 0
  %91 = vmatpush1.bf16.msra.mxu0 0
  %92 = vmatprep.subr.bf16.mxu0 0
  %93 = vmatpush1.bf16.msra.mxu0 0
  %94 = vmatprep.subr.bf16.mxu0 0
  %95 = vmatpush1.bf16.msra.mxu0 0
  %96 = vmatprep.subr.bf16.mxu0 0
  %97 = vmatpush1.bf16.msra.mxu0 0
  %98 = vmatprep.subr.bf16.mxu0 0
  %99 = vmatpush1.bf16.msra.mxu0 0
  %100 = vmatprep.subr.bf16.mxu0 0
  %101 = vmatpush1.bf16.msra.mxu0 0
  %102 = vmatprep.subr.bf16.mxu0 0
  %103 = vmatpush1.bf16.msra.mxu0 0
  %104 = vmatprep.subr.bf16.mxu0 0
  %105 = vmatpush1.bf16.msra.mxu0 0
  %106 = vmatprep.subr.bf16.mxu0 0
  %107 = vmatpush1.bf16.msra.mxu0 0
  %108 = vmatprep.subr.bf16.mxu0 0
  %109 = vmatpush1.bf16.msra.mxu0 0
  %110 = vmatprep.subr.bf16.mxu0 0
  %111 = vmatpush1.bf16.msra.mxu0 0
  %112 = vmatprep.subr.bf16.mxu0 0
  %113 = vmatpush1.bf16.msra.mxu0 0
  %114 = vmatprep.subr.bf16.mxu0 0
  %115 = vmatpush1.bf16.msra.mxu0 0
  %116 = vmatprep.mubr.bf16.mxu0 0
  %117 = vmatmul.mubr.bf16.gmra.mrb[0].mxu0 %v79
  %v118 = vpop.f32.mrb[0].mxu0
  %v119 = vadd.f32 %v53, %v118
  %v120 = vpop.f32.mrb[0].mxu0
  %v121 = vpop.f32.mrb[0].mxu0
  %v122 = vadd.f32 %v53, %v121
  %v123 = vpop.f32.mrb[0].mxu0
  %124 = vmatprep.mubr.bf16.mxu0 0
  %125 = vmatmul.mubr.bf16.gmra.mrb[0].mxu0 %v82
  %v126 = vpop.f32.mrb[0].mxu0
  %v127 = vadd.f32 %v53, %v126
  %v128 = vpop.f32.mrb[0].mxu0
  %v129 = vpop.f32.mrb[0].mxu0
  %v130 = vadd.f32 %v53, %v129
  %v131 = vpop.f32.mrb[0].mxu0
  %132 = vdwg.mxu0
  %v133 = vadd.f32 %v36, %v119
  %v134 = vadd.f32 %v37, %v122
  %v135 = vadd.f32 %v38, %v127
  %v136 = vadd.f32 %v39, %v130
  %v137 = vld [vmem:[%s4] sm:$0x1]
  %v138 = vld [vmem:[%s5] sm:$0x1]
  %v139 = vsel %vm77, %v133, 0.0
  %140 = vadd.xlane.f32.xlu0 %v139
  %v141 = vpop.xlane.xlu0 %140
  %v142 = vsel %vm77, %v134, 0.0
  %143 = vadd.xlane.f32.xlu0 %v142
  %v144 = vpop.xlane.xlu0 %143
  %v145 = vsel %vm77, %v135, 0.0
  %146 = vadd.xlane.f32.xlu0 %v145
  %v147 = vpop.xlane.xlu0 %146
  %v148 = vsel %vm77, %v136, 0.0
  %149 = vadd.xlane.f32.xlu0 %v148
  %v150 = vpop.xlane.xlu0 %149
  %v151 = vrcp.pop 32.0
  %v152 = vmul.f32 %v141, %v151
  %v153 = vmul.f32 %v144, %v151
  %v154 = vmul.f32 %v147, %v151
  %v155 = vmul.f32 %v150, %v151
  %v156 = vsub.f32 %v133, %v152
  %v157 = vsub.f32 %v134, %v153
  %v158 = vsub.f32 %v135, %v154
  %v159 = vsub.f32 %v136, %v155
  %v160 = vmul.f32 %v156, %v156
  %v161 = vmul.f32 %v157, %v157
  %v162 = vmul.f32 %v158, %v158
  %v163 = vmul.f32 %v159, %v159
  %v164 = vsel %vm77, %v160, 0.0
  %165 = vadd.xlane.f32.xlu0 %v164
  %v166 = vpop.xlane.xlu0 %165
  %v167 = vsel %vm77, %v161, 0.0
  %168 = vadd.xlane.f32.xlu0 %v167
  %v169 = vpop.xlane.xlu0 %168
  %v170 = vsel %vm77, %v162, 0.0
  %171 = vadd.xlane.f32.xlu0 %v170
  %v172 = vpop.xlane.xlu0 %171
  %v173 = vsel %vm77, %v163, 0.0
  %174 = vadd.xlane.f32.xlu0 %v173
  %v175 = vpop.xlane.xlu0 %174
  %v176 = vmul.f32 %v166, %v151
  %v177 = vmul.f32 %v169, %v151
  %v178 = vmul.f32 %v172, %v151
  %v179 = vmul.f32 %v175, %v151
  %v180 = vadd.f32 %v176, 1e-12
  %v181 = vadd.f32 %v177, 1e-12
  %v182 = vadd.f32 %v178, 1e-12
  %v183 = vadd.f32 %v179, 1e-12
  %v184 = vrsqrt.pop %v180
  %v185 = vrsqrt.pop %v181
  %v186 = vrsqrt.pop %v182
  %v187 = vrsqrt.pop %v183
  %v188 = vmul.f32 %v156, %v184
  %v189 = vmul.f32 %v157, %v185
  %v190 = vmul.f32 %v158, %v186
  %v191 = vmul.f32 %v159, %v187
  %v193 = vlaneseq
  %v194 = vshrl.u32 %v193, 7
  %v195 = vsub.s32 0, %v194
  %v196 = vrot.slane %v137, %v195
  %v198 = vmul.f32 %v188, %v196
  %v199 = vmul.f32 %v189, %v196
  %v200 = vmul.f32 %v190, %v196
  %v201 = vmul.f32 %v191, %v196
  %v203 = vlaneseq
  %v204 = vshrl.u32 %v203, 7
  %v205 = vsub.s32 0, %v204
  %v206 = vrot.slane %v138, %v205
  %v208 = vadd.f32 %v198, %v206
  %v209 = vadd.f32 %v199, %v206
  %v210 = vadd.f32 %v200, %v206
  %v211 = vadd.f32 %v201, %v206
  %v212 = vpack.c.bf16 %v209, %v208
  %v213 = vpack.c.bf16 %v211, %v210
  %v214 = vld [vmem:[%s6] sm:$0xf]
  %v215 = vld [vmem:[%s6 + $0x4] sm:$0xf]
  %v216 = vld [vmem:[%s6 + $0x8] sm:$0xf]
  %v217 = vld [vmem:[%s6 + $0xc] sm:$0xf]
  %v218 = vld [vmem:[%s7] sm:$0x1]
  %v220 = vlaneseq
  %v221 = vshrl.u32 %v220, 7
  %v222 = vsub.s32 0, %v221
  %v223 = vrot.slane %v218, %v222
  %v229 = vunpack.c.l.b16 %v214
  %v230 = vunpack.c.l.b16 %v215
  %v231 = vunpack.c.l.b16 %v216
  %v232 = vunpack.c.l.b16 %v217
  %v233 = vpack.c.b16 %v230, %v229
  %v234 = vpack.c.b16 %v232, %v231
  %v238 = vsel %vm77, %v212, 0
  %v241 = vsel %vm77, %v213, 0
  %243 = vmatprep.subr.bf16.mxu0 0
  %244 = vmatpush1.bf16.msra.mxu0 %v233
  %245 = vmatprep.subr.bf16.mxu0 0
  %246 = vmatpush1.bf16.msra.mxu0 %v234
  %247 = vmatprep.subr.bf16.mxu0 0
  %248 = vmatpush1.bf16.msra.mxu0 0
  %249 = vmatprep.subr.bf16.mxu0 0
  %250 = vmatpush1.bf16.msra.mxu0 0
  %251 = vmatprep.subr.bf16.mxu0 0
  %252 = vmatpush1.bf16.msra.mxu0 0
  %253 = vmatprep.subr.bf16.mxu0 0
  %254 = vmatpush1.bf16.msra.mxu0 0
  %255 = vmatprep.subr.bf16.mxu0 0
  %256 = vmatpush1.bf16.msra.mxu0 0
  %257 = vmatprep.subr.bf16.mxu0 0
  %258 = vmatpush1.bf16.msra.mxu0 0
  %259 = vmatprep.subr.bf16.mxu0 0
  %260 = vmatpush1.bf16.msra.mxu0 0
  %261 = vmatprep.subr.bf16.mxu0 0
  %262 = vmatpush1.bf16.msra.mxu0 0
  %263 = vmatprep.subr.bf16.mxu0 0
  %264 = vmatpush1.bf16.msra.mxu0 0
  %265 = vmatprep.subr.bf16.mxu0 0
  %266 = vmatpush1.bf16.msra.mxu0 0
  %267 = vmatprep.subr.bf16.mxu0 0
  %268 = vmatpush1.bf16.msra.mxu0 0
  %269 = vmatprep.subr.bf16.mxu0 0
  %270 = vmatpush1.bf16.msra.mxu0 0
  %271 = vmatprep.subr.bf16.mxu0 0
  %272 = vmatpush1.bf16.msra.mxu0 0
  %273 = vmatprep.subr.bf16.mxu0 0
  %274 = vmatpush1.bf16.msra.mxu0 0
  %275 = vmatprep.mubr.bf16.mxu0 0
  %276 = vmatmul.mubr.bf16.gmra.mrb[0].mxu0 %v238
  %v277 = vpop.f32.mrb[0].mxu0
  %v278 = vadd.f32 %v223, %v277
  %v279 = vpop.f32.mrb[0].mxu0
  %v280 = vpop.f32.mrb[0].mxu0
  %v281 = vadd.f32 %v223, %v280
  %v282 = vpop.f32.mrb[0].mxu0
  %283 = vmatprep.mubr.bf16.mxu0 0
  %284 = vmatmul.mubr.bf16.gmra.mrb[0].mxu0 %v241
  %v285 = vpop.f32.mrb[0].mxu0
  %v286 = vadd.f32 %v223, %v285
  %v287 = vpop.f32.mrb[0].mxu0
  %v288 = vpop.f32.mrb[0].mxu0
  %v289 = vadd.f32 %v223, %v288
  %v290 = vpop.f32.mrb[0].mxu0
  %291 = vdwg.mxu0
  %v292 = vmul.f32 %v278, 0.5
  %v293 = vmul.f32 %v281, 0.5
  %v294 = vmul.f32 %v286, 0.5
  %v295 = vmul.f32 %v289, 0.5
  %v296 = vmul.f32 %v278, 0.70710677
  %v297 = vmul.f32 %v281, 0.70710677
  %v298 = vmul.f32 %v286, 0.70710677
  %v299 = vmul.f32 %v289, 0.70710677
  %vm300 = vcmp.ge.f32.partialorder %v296, 0.0
  %vm301 = vcmp.ge.f32.partialorder %v297, 0.0
  %vm302 = vcmp.ge.f32.partialorder %v298, 0.0
  %vm303 = vcmp.ge.f32.partialorder %v299, 0.0
  %v304 = vsel %vm300, 1.0, -1.0
  %v305 = vsel %vm301, 1.0, -1.0
  %v306 = vsel %vm302, 1.0, -1.0
  %v307 = vsel %vm303, 1.0, -1.0
  %v308 = vand.u32 2147483647, %v296
  %v309 = vand.u32 2147483647, %v297
  %v310 = vand.u32 2147483647, %v298
  %v311 = vand.u32 2147483647, %v299
  %v312 = vmul.f32 %v308, 0.3275911
  %v313 = vmul.f32 %v309, 0.3275911
  %v314 = vmul.f32 %v310, 0.3275911
  %v315 = vmul.f32 %v311, 0.3275911
  %v316 = vadd.f32 %v312, 1.0
  %v317 = vadd.f32 %v313, 1.0
  %v318 = vadd.f32 %v314, 1.0
  %v319 = vadd.f32 %v315, 1.0
  %v320 = vrcp.pop %v316
  %v321 = vmul.f32 1.0, %v320
  %v322 = vrcp.pop %v317
  %v323 = vmul.f32 1.0, %v322
  %v324 = vrcp.pop %v318
  %v325 = vmul.f32 1.0, %v324
  %v326 = vrcp.pop %v319
  %v327 = vmul.f32 1.0, %v326
  %v328 = vmul.f32 %v321, 1.0614054
  %v329 = vmul.f32 %v323, 1.0614054
  %v330 = vmul.f32 %v325, 1.0614054
  %v331 = vmul.f32 %v327, 1.0614054
  %v332 = vadd.f32 %v328, -1.4531521
  %v333 = vadd.f32 %v329, -1.4531521
  %v334 = vadd.f32 %v330, -1.4531521
  %v335 = vadd.f32 %v331, -1.4531521
  %v336 = vmul.f32 %v332, %v321
  %v337 = vmul.f32 %v333, %v323
  %v338 = vmul.f32 %v334, %v325
  %v339 = vmul.f32 %v335, %v327
  %v340 = vadd.f32 %v336, 1.4214138
  %v341 = vadd.f32 %v337, 1.4214138
  %v342 = vadd.f32 %v338, 1.4214138
  %v343 = vadd.f32 %v339, 1.4214138
  %v344 = vmul.f32 %v340, %v321
  %v345 = vmul.f32 %v341, %v323
  %v346 = vmul.f32 %v342, %v325
  %v347 = vmul.f32 %v343, %v327
  %v348 = vadd.f32 %v344, -0.28449672
  %v349 = vadd.f32 %v345, -0.28449672
  %v350 = vadd.f32 %v346, -0.28449672
  %v351 = vadd.f32 %v347, -0.28449672
  %v352 = vmul.f32 %v348, %v321
  %v353 = vmul.f32 %v349, %v323
  %v354 = vmul.f32 %v350, %v325
  %v355 = vmul.f32 %v351, %v327
  %v356 = vadd.f32 %v352, 0.2548296
  %v357 = vadd.f32 %v353, 0.2548296
  %v358 = vadd.f32 %v354, 0.2548296
  %v359 = vadd.f32 %v355, 0.2548296
  %v360 = vmul.f32 %v356, %v321
  %v361 = vmul.f32 %v357, %v323
  %v362 = vmul.f32 %v358, %v325
  %v363 = vmul.f32 %v359, %v327
  %v364 = vsub.f32 0.0, %v308
  %v365 = vsub.f32 0.0, %v309
  %v366 = vsub.f32 0.0, %v310
  %v367 = vsub.f32 0.0, %v311
  %v368 = vmul.f32 %v364, %v308
  %v369 = vmul.f32 %v365, %v309
  %v370 = vmul.f32 %v366, %v310
  %v371 = vmul.f32 %v367, %v311
  %v372 = vmul.f32 %v368, 1.442695
  %v373 = vpow.pop %v372
  %v374 = vmul.f32 %v369, 1.442695
  %v375 = vpow.pop %v374
  %v376 = vmul.f32 %v370, 1.442695
  %v377 = vpow.pop %v376
  %v378 = vmul.f32 %v371, 1.442695
  %v379 = vpow.pop %v378
  %v380 = vmul.f32 %v360, %v373
  %v381 = vmul.f32 %v361, %v375
  %v382 = vmul.f32 %v362, %v377
  %v383 = vmul.f32 %v363, %v379
  %v384 = vsub.f32 1.0, %v380
  %v385 = vsub.f32 1.0, %v381
  %v386 = vsub.f32 1.0, %v382
  %v387 = vsub.f32 1.0, %v383
  %v388 = vmul.f32 %v304, %v384
  %v389 = vmul.f32 %v305, %v385
  %v390 = vmul.f32 %v306, %v386
  %v391 = vmul.f32 %v307, %v387
  %v392 = vadd.f32 %v388, 1.0
  %v393 = vadd.f32 %v389, 1.0
  %v394 = vadd.f32 %v390, 1.0
  %v395 = vadd.f32 %v391, 1.0
  %v396 = vmul.f32 %v292, %v392
  %v397 = vmul.f32 %v293, %v393
  %v398 = vmul.f32 %v294, %v394
  %v399 = vmul.f32 %v295, %v395
  %v400 = vpack.c.bf16 %v397, %v396
  %v401 = vpack.c.bf16 %v399, %v398
  %v402 = vld [vmem:[%s8] sm:$0xf]
  %v403 = vld [vmem:[%s8 + $0x4] sm:$0xf]
  %v404 = vld [vmem:[%s8 + $0x8] sm:$0xf]
  %v405 = vld [vmem:[%s8 + $0xc] sm:$0xf]
  %v406 = vld [vmem:[%s8 + $0x10] sm:$0xf]
  %v407 = vld [vmem:[%s8 + $0x14] sm:$0xf]
  %v408 = vld [vmem:[%s8 + $0x18] sm:$0xf]
  %v409 = vld [vmem:[%s8 + $0x1c] sm:$0xf]
  %v410 = vld [vmem:[%s8 + $0x20] sm:$0xf]
  %v411 = vld [vmem:[%s8 + $0x24] sm:$0xf]
  %v412 = vld [vmem:[%s8 + $0x28] sm:$0xf]
  %v413 = vld [vmem:[%s8 + $0x2c] sm:$0xf]
  %v414 = vld [vmem:[%s8 + $0x30] sm:$0xf]
  %v415 = vld [vmem:[%s8 + $0x34] sm:$0xf]
  %v416 = vld [vmem:[%s8 + $0x38] sm:$0xf]
  %v417 = vld [vmem:[%s8 + $0x3c] sm:$0xf]
  %v418 = vld [vmem:[%s9] sm:$0x1]
  %v420 = vlaneseq
  %v421 = vshrl.u32 %v420, 7
  %v422 = vsub.s32 0, %v421
  %v423 = vrot.slane %v418, %v422
  %v441 = vunpack.c.l.b16 %v402
  %v442 = vunpack.c.l.b16 %v403
  %v443 = vunpack.c.l.b16 %v404
  %v444 = vunpack.c.l.b16 %v405
  %v445 = vunpack.c.l.b16 %v406
  %v446 = vunpack.c.l.b16 %v407
  %v447 = vunpack.c.l.b16 %v408
  %v448 = vunpack.c.l.b16 %v409
  %v449 = vunpack.c.l.b16 %v410
  %v450 = vunpack.c.l.b16 %v411
  %v451 = vunpack.c.l.b16 %v412
  %v452 = vunpack.c.l.b16 %v413
  %v453 = vunpack.c.l.b16 %v414
  %v454 = vunpack.c.l.b16 %v415
  %v455 = vunpack.c.l.b16 %v416
  %v456 = vunpack.c.l.b16 %v417
  %v457 = vpack.c.b16 %v442, %v441
  %v458 = vpack.c.b16 %v444, %v443
  %v459 = vpack.c.b16 %v446, %v445
  %v460 = vpack.c.b16 %v448, %v447
  %v461 = vpack.c.b16 %v450, %v449
  %v462 = vpack.c.b16 %v452, %v451
  %v463 = vpack.c.b16 %v454, %v453
  %v464 = vpack.c.b16 %v456, %v455
  %473 = vmatprep.subr.bf16.mxu0 0
  %474 = vmatpush1.bf16.msra.mxu0 %v457
  %475 = vmatprep.subr.bf16.mxu0 0
  %476 = vmatpush1.bf16.msra.mxu0 %v458
  %477 = vmatprep.subr.bf16.mxu0 0
  %478 = vmatpush1.bf16.msra.mxu0 %v459
  %479 = vmatprep.subr.bf16.mxu0 0
  %480 = vmatpush1.bf16.msra.mxu0 %v460
  %481 = vmatprep.subr.bf16.mxu0 0
  %482 = vmatpush1.bf16.msra.mxu0 %v461
  %483 = vmatprep.subr.bf16.mxu0 0
  %484 = vmatpush1.bf16.msra.mxu0 %v462
  %485 = vmatprep.subr.bf16.mxu0 0
  %486 = vmatpush1.bf16.msra.mxu0 %v463
  %487 = vmatprep.subr.bf16.mxu0 0
  %488 = vmatpush1.bf16.msra.mxu0 %v464
  %489 = vmatprep.subr.bf16.mxu0 0
  %490 = vmatpush1.bf16.msra.mxu0 0
  %491 = vmatprep.subr.bf16.mxu0 0
  %492 = vmatpush1.bf16.msra.mxu0 0
  %493 = vmatprep.subr.bf16.mxu0 0
  %494 = vmatpush1.bf16.msra.mxu0 0
  %495 = vmatprep.subr.bf16.mxu0 0
  %496 = vmatpush1.bf16.msra.mxu0 0
  %497 = vmatprep.subr.bf16.mxu0 0
  %498 = vmatpush1.bf16.msra.mxu0 0
  %499 = vmatprep.subr.bf16.mxu0 0
  %500 = vmatpush1.bf16.msra.mxu0 0
  %501 = vmatprep.subr.bf16.mxu0 0
  %502 = vmatpush1.bf16.msra.mxu0 0
  %503 = vmatprep.subr.bf16.mxu0 0
  %504 = vmatpush1.bf16.msra.mxu0 0
  %505 = vmatprep.mubr.bf16.mxu0 0
  %506 = vmatmul.mubr.bf16.gmra.mrb[0].mxu0 %v400
  %v507 = vpop.f32.mrb[0].mxu0
  %v508 = vadd.f32 %v423, %v507
  %v509 = vpop.f32.mrb[0].mxu0
  %v510 = vpop.f32.mrb[0].mxu0
  %v511 = vadd.f32 %v423, %v510
  %v512 = vpop.f32.mrb[0].mxu0
  %513 = vmatprep.mubr.bf16.mxu0 0
  %514 = vmatmul.mubr.bf16.gmra.mrb[0].mxu0 %v401
  %v515 = vpop.f32.mrb[0].mxu0
  %v516 = vadd.f32 %v423, %v515
  %v517 = vpop.f32.mrb[0].mxu0
  %v518 = vpop.f32.mrb[0].mxu0
  %v519 = vadd.f32 %v423, %v518
  %v520 = vpop.f32.mrb[0].mxu0
  %521 = vdwg.mxu0
  %v522 = vadd.f32 %v133, %v508
  %v523 = vadd.f32 %v134, %v511
  %v524 = vadd.f32 %v135, %v516
  %v525 = vadd.f32 %v136, %v519
  %526 = vst.msk [vmem:[%s10] sm:$0xff] %vm77, %v522
  %527 = vst.msk [vmem:[%s10 + $0x8] sm:$0xff] %vm77, %v523
  %528 = vst.msk [vmem:[%s10 + $0x10] sm:$0xff] %vm77, %v524
  %529 = vst.msk [vmem:[%s10 + $0x18] sm:$0xff] %vm77, %v525
  // Predicated region
  $region42: #{student_ast_forward.11} parent=0 // pred_check
    _
  $region43: #{student_ast_forward.11} parent=0 // pred_check_branch
    %531 = sbr.rel (0) target = $region45
  $region44: #{student_ast_forward.11} parent=0 // pred_region
    _
  $region45: #{student_ast_forward.11} parent=0 // pred_fallthru
    _
  // Predicated region
  $region46: #{student_ast_forward.11} parent=0 // pred_check
    _
  $region47: #{student_ast_forward.11} parent=0 // pred_check_branch
    %533 = sbr.rel (0) target = $region49
  $region48: #{student_ast_forward.11} parent=0 // pred_region
    _
  $region49: #{student_ast_forward.11} parent=0 // pred_fallthru
    _

// kernel: student_ast_forward.15
$region0: #{student_ast_forward.15}
  #allocation0 [shape = 'u32[]', space=smem, size = 0x4, offset = 0x4, fixed_abs, tag = 'smem constant byte address 0x4 - core index']
  #allocation1 [shape = 'u32[144,128]{1,0:T(1,128)}', space=vmem, size = 0x12000, scoped, tag = 'internal scratch']
  %s0 = inlined_call_operand.vmem [shape: f32[2,2,32], index: 0, kind: input, shape index: {}]
  %s1 = inlined_call_operand.vmem [shape: f32[1,32], index: 1, kind: input, shape index: {}]
  %s2 = inlined_call_operand.vmem [shape: f32[1,32], index: 2, kind: input, shape index: {}]
  %s3 = inlined_call_operand.vmem [shape: bf16[64,128], index: 3, kind: input, shape index: {}]
  %s4 = inlined_call_operand.vmem [shape: f32[1,128], index: 4, kind: input, shape index: {}]
  %s5 = inlined_call_operand.hbm [shape: f32[2,128], index: 5, kind: output, shape index: {}]
  %s6 = sld [smem:[#allocation0]]
  $region30: #{student_ast_forward.15} parent=0
    _
  %s8 = ssub.s32 1, %s6
  %s9 = scalar_select 0, %s8, %s6
  $region1: #{student_ast_forward.15} parent=0
    #allocation2 [shape = 'u8[1024]{0}', space=vmem, size = 0x400, scoped, tag = 'output window, operand 0, single buffered']
    #allocation3 [shape = 's32[1]{0}', space=sflag, size = 0x4, scoped, tag = 'scoped memory for student_ast_forward.15']
    %10 = vsyncpa [#allocation3], 0
    // Predicated region
    $region2: #{student_ast_forward.15} parent=1 // pred_check
      _
    $region3: #{student_ast_forward.15} parent=1 // pred_check_branch
      %12 = sbr.rel (0) target = $region5
    $region4: #{student_ast_forward.15} parent=1 // pred_region
      _
    $region5: #{student_ast_forward.15} parent=1 // pred_fallthru
      _
    // Predicated region
    $region6: #{student_ast_forward.15} parent=1 // pred_check
      _
    $region7: #{student_ast_forward.15} parent=1 // pred_check_branch
      %14 = sbr.rel (0) target = $region9
    $region8: #{student_ast_forward.15} parent=1 // pred_region
      _
    $region9: #{student_ast_forward.15} parent=1 // pred_fallthru
      _
    // Predicated region
    $region10: #{student_ast_forward.15} parent=1 // pred_check
      _
    $region11: #{student_ast_forward.15} parent=1 // pred_check_branch
      %16 = sbr.rel (0) target = $region13
    $region12: #{student_ast_forward.15} parent=1 // pred_region
      _
    $region13: #{student_ast_forward.15} parent=1 // pred_fallthru
      _
    // Predicated region
    $region14: #{student_ast_forward.15} parent=1 // pred_check
      _
    $region15: #{student_ast_forward.15} parent=1 // pred_check_branch
      %18 = sbr.rel (0) target = $region17
    $region16: #{student_ast_forward.15} parent=1 // pred_region
      _
    $region17: #{student_ast_forward.15} parent=1 // pred_fallthru
      _
    // Predicated region
    $region18: #{student_ast_forward.15} parent=1 // pred_check
      _
    $region19: #{student_ast_forward.15} parent=1 // pred_check_branch
      %20 = sbr.rel (0) target = $region21
    $region20: #{student_ast_forward.15} parent=1 // pred_region
      _
    $region21: #{student_ast_forward.15} parent=1 // pred_fallthru
      _
    %v22 = vld [vmem:[%s0] sm:$0x3]
    %v23 = vld [vmem:[%s0 + $0x2] sm:$0x3]
    %v24 = vld [vmem:[%s1] sm:$0x1]
    %v25 = vld [vmem:[%s2] sm:$0x1]
    %vm26 = vcmask 254976
    %v27 = vsel %vm26, %v22, 0.0
    %28 = vadd.xlane.f32.xlu0 %v27
    %v29 = vpop.xlane.xlu0 %28
    %v30 = vsel %vm26, %v23, 0.0
    %31 = vadd.xlane.f32.xlu0 %v30
    %v32 = vpop.xlane.xlu0 %31
    %v33 = vrcp.pop 32.0
    %v34 = vmul.f32 %v29, %v33
    %v35 = vmul.f32 %v32, %v33
    %v36 = vsub.f32 %v22, %v34
    %v37 = vsub.f32 %v23, %v35
    %v38 = vmul.f32 %v36, %v36
    %v39 = vmul.f32 %v37, %v37
    %v40 = vsel %vm26, %v38, 0.0
    %41 = vadd.xlane.f32.xlu0 %v40
    %v42 = vpop.xlane.xlu0 %41
    %v43 = vsel %vm26, %v39, 0.0
    %44 = vadd.xlane.f32.xlu0 %v43
    %v45 = vpop.xlane.xlu0 %44
    %v46 = vmul.f32 %v42, %v33
    %v47 = vmul.f32 %v45, %v33
    %v48 = vadd.f32 %v46, 1e-12
    %v49 = vadd.f32 %v47, 1e-12
    %v50 = vrsqrt.pop %v48
    %v51 = vrsqrt.pop %v49
    %v52 = vmul.f32 %v36, %v50
    %v53 = vmul.f32 %v37, %v51
    %v55 = vlaneseq
    %v56 = vshrl.u32 %v55, 7
    %v57 = vsub.s32 0, %v56
    %v58 = vrot.slane %v24, %v57
    %v60 = vmul.f32 %v52, %v58
    %v61 = vmul.f32 %v53, %v58
    %v63 = vlaneseq
    %v64 = vshrl.u32 %v63, 7
    %v65 = vsub.s32 0, %v64
    %v66 = vrot.slane %v25, %v65
    %v68 = vadd.f32 %v60, %v66
    %v69 = vadd.f32 %v61, %v66
    %v72 = vrot.slane %v69, 7
    %vm73 = vcmask 1041409
    %v74 = vsel %vm73, %v72, %v68
    %v76 = vrot.slane %v68, 1
    %v77 = vsel %vm73, %v69, %v76
    %78 = vrot.lane.b32.xlu0 %v77, 32
    %v79 = vpop.permute.xlu0 %78
    %vm81 = vcmask 261120
    %v82 = vsel %vm81, %v74, %v79
    %v83 = vpack.c.bf16 %v82, %v82
    %v84 = vld [vmem:[%s3] sm:$0xf]
    %v85 = vld [vmem:[%s3 + $0x4] sm:$0xf]
    %v86 = vld [vmem:[%s3 + $0x8] sm:$0xf]
    %v87 = vld [vmem:[%s3 + $0xc] sm:$0xf]
    %v88 = vld [vmem:[%s3 + $0x10] sm:$0xf]
    %v89 = vld [vmem:[%s3 + $0x14] sm:$0xf]
    %v90 = vld [vmem:[%s3 + $0x18] sm:$0xf]
    %v91 = vld [vmem:[%s3 + $0x1c] sm:$0xf]
    %v92 = vld [vmem:[%s4] sm:$0x1]
    %v94 = vlaneseq
    %v95 = vshrl.u32 %v94, 7
    %v96 = vsub.s32 0, %v95
    %v97 = vrot.slane %v92, %v96
    %v107 = vunpack.c.l.b16 %v84
    %v108 = vunpack.c.l.b16 %v85
    %v109 = vunpack.c.l.b16 %v86
    %v110 = vunpack.c.l.b16 %v87
    %v111 = vunpack.c.l.b16 %v88
    %v112 = vunpack.c.l.b16 %v89
    %v113 = vunpack.c.l.b16 %v90
    %v114 = vunpack.c.l.b16 %v91
    %v115 = vpack.c.b16 %v108, %v107
    %v116 = vpack.c.b16 %v110, %v109
    %v117 = vpack.c.b16 %v112, %v111
    %v118 = vpack.c.b16 %v114, %v113
    %vm123 = vcmask 523264
    %v125 = vsel %vm123, %v83, 0
    %127 = vmatprep.subr.bf16.mxu0 0
    %128 = vmatpush1.bf16.msra.mxu0 %v115
    %129 = vmatprep.subr.bf16.mxu0 0
    %130 = vmatpush1.bf16.msra.mxu0 %v116
    %131 = vmatprep.subr.bf16.mxu0 0
    %132 = vmatpush1.bf16.msra.mxu0 %v117
    %133 = vmatprep.subr.bf16.mxu0 0
    %134 = vmatpush1.bf16.msra.mxu0 %v118
    %135 = vmatprep.subr.bf16.mxu0 0
    %136 = vmatpush1.bf16.msra.mxu0 0
    %137 = vmatprep.subr.bf16.mxu0 0
    %138 = vmatpush1.bf16.msra.mxu0 0
    %139 = vmatprep.subr.bf16.mxu0 0
    %140 = vmatpush1.bf16.msra.mxu0 0
    %141 = vmatprep.subr.bf16.mxu0 0
    %142 = vmatpush1.bf16.msra.mxu0 0
    %143 = vmatprep.subr.bf16.mxu0 0
    %144 = vmatpush1.bf16.msra.mxu0 0
    %145 = vmatprep.subr.bf16.mxu0 0
    %146 = vmatpush1.bf16.msra.mxu0 0
    %147 = vmatprep.subr.bf16.mxu0 0
    %148 = vmatpush1.bf16.msra.mxu0 0
    %149 = vmatprep.subr.bf16.mxu0 0
    %150 = vmatpush1.bf16.msra.mxu0 0
    %151 = vmatprep.subr.bf16.mxu0 0
    %152 = vmatpush1.bf16.msra.mxu0 0
    %153 = vmatprep.subr.bf16.mxu0 0
    %154 = vmatpush1.bf16.msra.mxu0 0
    %155 = vmatprep.subr.bf16.mxu0 0
    %156 = vmatpush1.bf16.msra.mxu0 0
    %157 = vmatprep.subr.bf16.mxu0 0
    %158 = vmatpush1.bf16.msra.mxu0 0
    %159 = vmatprep.mubr.bf16.mxu0 0
    %160 = vmatmul.mubr.bf16.gmra.mrb[0].mxu0 %v125
    %v161 = vpop.f32.mrb[0].mxu0
    %v162 = vadd.f32 %v97, %v161
    %v163 = vpop.f32.mrb[0].mxu0
    %v164 = vpop.f32.mrb[0].mxu0
    %v165 = vpop.f32.mrb[0].mxu0
    %166 = vdwg.mxu0
    %167 = vst [vmem:[#allocation2] sm:$0x3] %v162
    // Predicated region
    $region22: #{student_ast_forward.15} parent=1 // pred_check
      _
    $region23: #{student_ast_forward.15} parent=1 // pred_check_branch
      %169 = sbr.rel (0) target = $region25
    $region24: #{student_ast_forward.15} parent=1 // pred_region
      %s171 = ssub.s32 32, 32
      %172 = vsyncadd [#allocation3], %s171
      %s174 = sshll.u32 [#allocation2], 4
      %s175 = int_to_ptr.vmem [resolvable:$true] %s174
      %177 = dma.vmem_to_hbm [thread:$0]  %s175, 32, %s5, [#allocation3]
    $region25: #{student_ast_forward.15} parent=1 // pred_fallthru
      _
    // Predicated region
    $region26: #{student_ast_forward.15} parent=1 // pred_check
      _
    $region27: #{student_ast_forward.15} parent=1 // pred_check_branch
      %179 = sbr.rel (0) target = $region29
    $region28: #{student_ast_forward.15} parent=1 // pred_region
      %180 = dma.done [#allocation3], 32
    $region29: #{student_ast_forward.15} parent=1 // pred_fallthru
      _
    %181 = vsyncpa [#allocation3], 1

</llo_original>
